<compile_context>
chip_gen: v7x
topology: tpu7x:2x2x1
jax: 0.10.0
libtpu: 0.0.40
codegen_flags: <defaults>
</compile_context>

<pallas_src>
import functools
import math

import jax
import jax.numpy as jnp
from jax.experimental import pallas as pl
from jax.experimental.pallas import tpu as pltpu


# ----------------------------------------------------------------------------
# Fused energy kernel
# ----------------------------------------------------------------------------
def _energy_kernel(x_ref, e_ref,
                   wt1_ref, bt1_ref, wt2_ref, bt2_ref, wt3_ref, bt3_ref,
                   wia_ref, wib_ref, bi1_ref, wi2_ref, bi2_ref, wi3_ref,
                   bi3_ref, o_ref, *, n):
    """energy[b] = sum_i traj(x_i) + sum_ij edges[b,i,j] * inter(x_i, x_j).

    x_ref : (n, TB, 4L)   particle-major trajectories for this batch tile
    e_ref : (TB, n*n)     flattened edge weights (p = i*n + j)
    o_ref : (TB, 1)
    """
    f32 = jnp.float32
    wt1 = wt1_ref[...]
    bt1 = bt1_ref[...]
    wt2 = wt2_ref[...]
    bt2 = bt2_ref[...]
    wt3 = wt3_ref[...]        # (1, U)   row vector -> VPU reduce
    bt3 = bt3_ref[...]        # (1, 1)
    wia = wia_ref[...]        # (4L, U)  int1 weight, x_i half
    wib = wib_ref[...]        # (4L, U)  int1 weight, x_j half
    bi1 = bi1_ref[...]
    wi2 = wi2_ref[...]
    bi2 = bi2_ref[...]
    wi3 = wi3_ref[...]        # (1, U)
    bi3 = bi3_ref[...]        # (1, 1)
    edges = e_ref[...]        # (TB, n*n)

    tb = e_ref.shape[0]
    acc = jnp.zeros((tb, 1), f32)

    # --- per-particle: trajectory energy + split layer-1 of the int MLP -----
    a_list = []
    c_list = []
    for i in range(n):
        xi = x_ref[i]                                             # (TB, 4L)

        # trajectory MLP (layers 1-2 on MXU, layer 3 as VPU reduce)
        h = jnp.maximum(
            jnp.dot(xi, wt1, preferred_element_type=f32) + bt1, 0.0)
        h = jnp.maximum(
            jnp.dot(h, wt2, preferred_element_type=f32) + bt2, 0.0)
        acc = acc + jnp.sum(h * wt3, axis=1, keepdims=True) + bt3

        # int layer-1 halves (bias folded into the x_j half)
        a_list.append(jnp.dot(xi, wia, preferred_element_type=f32))
        c_list.append(jnp.dot(xi, wib, preferred_element_type=f32) + bi1)

    # --- per-pair interaction energies, edge-weighted, fused reduction ------
    for i in range(n):
        for j in range(n):
            h1 = jnp.maximum(a_list[i] + c_list[j], 0.0)          # (TB, U)
            h2 = jnp.maximum(
                jnp.dot(h1, wi2, preferred_element_type=f32) + bi2, 0.0)
            e_ij = jnp.sum(h2 * wi3, axis=1, keepdims=True) + bi3  # (TB, 1)
            p = i * n + j
            acc = acc + edges[:, p:p + 1] * e_ij

    o_ref[...] = acc


def _pick_batch_tile(batch):
    """Largest batch tile that divides `batch` (multiple of 8 when tiled)."""
    if batch <= 512:
        return batch
    for t in (512, 256, 128, 64, 32, 16, 8):
        if batch % t == 0:
            return t
    return batch


# ----------------------------------------------------------------------------
# Model forward (single fused pallas_call; wrapper does layout plumbing only)
# ----------------------------------------------------------------------------
def model_forward(params, x, edges, n, length):
    B = x.shape[0]
    L = length
    U = params["traj2"][0].shape[0]

    # Layout plumbing (outside the kernel): particle-major x, flat edges.
    x3 = jnp.transpose(x.reshape(B, n, 4 * L), (1, 0, 2))          # (n, B, 4L)
    e2 = edges.reshape(B, n * n).astype(jnp.float32)               # (B, n*n)

    wt1, bt1 = params["traj1"]
    wt2, bt2 = params["traj2"]
    wt3, bt3 = params["traj3"]
    wi1, bi1 = params["int1"]
    wi2, bi2 = params["int2"]
    wi3, bi3 = params["int3"]

    # Split int1 weight into x_i / x_j halves; layer-3 weights as row vectors.
    wia, wib = wi1[:4 * L], wi1[4 * L:]
    wt3r = wt3.reshape(1, U)
    wi3r = wi3.reshape(1, U)

    TB = _pick_batch_tile(B)
    grid = (B // TB,)

    def _const(shape):
        return pl.BlockSpec(shape, lambda b: (0, 0))

    in_specs = [
        pl.BlockSpec((n, TB, 4 * L), lambda b: (0, b, 0)),   # x (particle-major)
        pl.BlockSpec((TB, n * n), lambda b: (b, 0)),         # edges
        _const(wt1.shape), _const(bt1.shape),
        _const(wt2.shape), _const(bt2.shape),
        _const(wt3r.shape), _const(bt3.shape),
        _const(wia.shape), _const(wib.shape), _const(bi1.shape),
        _const(wi2.shape), _const(bi2.shape),
        _const(wi3r.shape), _const(bi3.shape),
    ]
    out_specs = pl.BlockSpec((TB, 1), lambda b: (b, 0))

    return pl.pallas_call(
        functools.partial(_energy_kernel, n=n),
        out_shape=jax.ShapeDtypeStruct((B, 1), jnp.float32),
        grid=grid,
        in_specs=in_specs,
        out_specs=out_specs,
        compiler_params=pltpu.CompilerParams(
            dimension_semantics=("parallel",),
            vmem_limit_bytes=32 * 1024 * 1024,
        ),
    )(x3, e2, wt1, bt1, wt2, bt2, wt3r, bt3,
      wia, wib, bi1, wi2, bi2, wi3r, bi3)


# ----------------------------------------------------------------------------
# Parameter init (deterministic, PyTorch nn.Linear-like uniform init)
# ----------------------------------------------------------------------------
def _linear_params(key, fan_in, fan_out):
    kw, kb = jax.random.split(key)
    bound = 1.0 / math.sqrt(fan_in)
    # Stored transposed relative to PyTorch: (fan_in, fan_out) so x @ W works.
    w = jax.random.uniform(kw, (fan_in, fan_out), jnp.float32, -bound, bound)
    b = jax.random.uniform(kb, (1, fan_out), jnp.float32, -bound, bound)
    return w, b


def init_params(key, n, length, units):
    keys = jax.random.split(key, 6)
    return {
        "traj1": _linear_params(keys[0], 4 * length, units),
        "traj2": _linear_params(keys[1], units, units),
        "traj3": _linear_params(keys[2], units, 1),
        "int1": _linear_params(keys[3], 8 * length, units),
        "int2": _linear_params(keys[4], units, units),
        "int3": _linear_params(keys[5], units, 1),
    }


# ----------------------------------------------------------------------------
# Pure-JAX reference (unsplit formulation) for a correctness check
# ----------------------------------------------------------------------------
def reference_forward(params, x, edges, n, length):
    B = x.shape[0]
    L = length

    def mlp(z, p1, p2, p3):
        z = jnp.maximum(z @ p1[0] + p1[1], 0.0)
        z = jnp.maximum(z @ p2[0] + p2[1], 0.0)
        return z @ p3[0] + p3[1]

    traj = mlp(x.reshape(B * n, 4 * L), params["traj1"], params["traj2"],
               params["traj3"]).reshape(B, n)
    c1 = jnp.repeat(jnp.arange(n), n)
    c2 = jnp.tile(jnp.arange(n), n)
    x4 = x.reshape(B, n, 4, L)
    pairs = jnp.concatenate([x4[:, c1], x4[:, c2]], axis=2).reshape(B * n * n,
                                                                    8 * L)
    inte = mlp(pairs, params["int1"], params["int2"],
               params["int3"]).reshape(B, n, n)
    return (jnp.sum(traj, axis=1, keepdims=True)
            + jnp.sum(edges * inte, axis=(1, 2)).reshape(-1, 1))


# ----------------------------------------------------------------------------
if __name__ == "__main__":
    n, length, units, batch = 2, 8, 32, 2

    key = jax.random.PRNGKey(0)
    kp, kx, ke = jax.random.split(key, 3)
    params = init_params(kp, n, length, units)
    x = jax.random.normal(kx, (batch, 4 * n, length), jnp.float32)
    edges = jax.random.normal(ke, (batch, n, n), jnp.float32)

    energy = model_forward(params, x, edges, n, length)
    energy = jax.block_until_ready(energy)

    ref = reference_forward(params, x, edges, n, length)
    assert energy.shape == (batch, 1)
    assert jnp.allclose(energy, ref, atol=1e-4, rtol=1e-4), (energy, ref)

    print("KERNEL_OK")
</pallas_src>

<mosaic_0001>
module attributes {stable_mosaic.version = 11 : i64} {
  func.func @_energy_kernel(%arg0: i32, %arg1: memref<2x2x32xf32, #tpu.memory_space<vmem>>, %arg2: memref<2x4xf32, #tpu.memory_space<vmem>>, %arg3: memref<32x32xf32, #tpu.memory_space<vmem>>, %arg4: memref<1x32xf32, #tpu.memory_space<vmem>>, %arg5: memref<32x32xf32, #tpu.memory_space<vmem>>, %arg6: memref<1x32xf32, #tpu.memory_space<vmem>>, %arg7: memref<1x32xf32, #tpu.memory_space<vmem>>, %arg8: memref<1x1xf32, #tpu.memory_space<vmem>>, %arg9: memref<32x32xf32, #tpu.memory_space<vmem>>, %arg10: memref<32x32xf32, #tpu.memory_space<vmem>>, %arg11: memref<1x32xf32, #tpu.memory_space<vmem>>, %arg12: memref<32x32xf32, #tpu.memory_space<vmem>>, %arg13: memref<1x32xf32, #tpu.memory_space<vmem>>, %arg14: memref<1x32xf32, #tpu.memory_space<vmem>>, %arg15: memref<1x1xf32, #tpu.memory_space<vmem>>, %arg16: memref<2x1xf32, #tpu.memory_space<vmem>>) attributes {dimension_semantics = [#tpu.dimension_semantics<parallel>], iteration_bounds = array<i64: 1>, scalar_prefetch = 0 : i64, scratch_operands = 0 : i64, tpu.core_type = #tpu.core_type<tc>, window_params = [{transform_indices = @transform_0, window_bounds = array<i64: 2, 2, 32>}, {transform_indices = @transform_1, window_bounds = array<i64: 2, 4>}, {pipeline_mode = #tpu.pipeline_mode<synchronous>, transform_indices = @transform_2, window_bounds = array<i64: 32, 32>}, {pipeline_mode = #tpu.pipeline_mode<synchronous>, transform_indices = @transform_3, window_bounds = array<i64: 1, 32>}, {pipeline_mode = #tpu.pipeline_mode<synchronous>, transform_indices = @transform_4, window_bounds = array<i64: 32, 32>}, {pipeline_mode = #tpu.pipeline_mode<synchronous>, transform_indices = @transform_5, window_bounds = array<i64: 1, 32>}, {pipeline_mode = #tpu.pipeline_mode<synchronous>, transform_indices = @transform_6, window_bounds = array<i64: 1, 32>}, {pipeline_mode = #tpu.pipeline_mode<synchronous>, transform_indices = @transform_7, window_bounds = array<i64: 1, 1>}, {pipeline_mode = #tpu.pipeline_mode<synchronous>, transform_indices = @transform_8, window_bounds = array<i64: 32, 32>}, {pipeline_mode = #tpu.pipeline_mode<synchronous>, transform_indices = @transform_9, window_bounds = array<i64: 32, 32>}, {pipeline_mode = #tpu.pipeline_mode<synchronous>, transform_indices = @transform_10, window_bounds = array<i64: 1, 32>}, {pipeline_mode = #tpu.pipeline_mode<synchronous>, transform_indices = @transform_11, window_bounds = array<i64: 32, 32>}, {pipeline_mode = #tpu.pipeline_mode<synchronous>, transform_indices = @transform_12, window_bounds = array<i64: 1, 32>}, {pipeline_mode = #tpu.pipeline_mode<synchronous>, transform_indices = @transform_13, window_bounds = array<i64: 1, 32>}, {pipeline_mode = #tpu.pipeline_mode<synchronous>, transform_indices = @transform_14, window_bounds = array<i64: 1, 1>}, {transform_indices = @transform_15, window_bounds = array<i64: 2, 1>}]} {
    %c0 = arith.constant 0 : index
    %c0_0 = arith.constant 0 : index
    %0 = vector.load %arg3[%c0, %c0_0] : memref<32x32xf32, #tpu.memory_space<vmem>>, vector<32x32xf32>
    %c0_1 = arith.constant 0 : index
    %c0_2 = arith.constant 0 : index
    %1 = vector.load %arg4[%c0_1, %c0_2] : memref<1x32xf32, #tpu.memory_space<vmem>>, vector<1x32xf32>
    %c0_3 = arith.constant 0 : index
    %c0_4 = arith.constant 0 : index
    %2 = vector.load %arg5[%c0_3, %c0_4] : memref<32x32xf32, #tpu.memory_space<vmem>>, vector<32x32xf32>
    %c0_5 = arith.constant 0 : index
    %c0_6 = arith.constant 0 : index
    %3 = vector.load %arg6[%c0_5, %c0_6] : memref<1x32xf32, #tpu.memory_space<vmem>>, vector<1x32xf32>
    %c0_7 = arith.constant 0 : index
    %c0_8 = arith.constant 0 : index
    %4 = vector.load %arg7[%c0_7, %c0_8] : memref<1x32xf32, #tpu.memory_space<vmem>>, vector<1x32xf32>
    %c0_9 = arith.constant 0 : index
    %c0_10 = arith.constant 0 : index
    %5 = vector.load %arg8[%c0_9, %c0_10] : memref<1x1xf32, #tpu.memory_space<vmem>>, vector<1x1xf32>
    %c0_11 = arith.constant 0 : index
    %c0_12 = arith.constant 0 : index
    %6 = vector.load %arg9[%c0_11, %c0_12] : memref<32x32xf32, #tpu.memory_space<vmem>>, vector<32x32xf32>
    %c0_13 = arith.constant 0 : index
    %c0_14 = arith.constant 0 : index
    %7 = vector.load %arg10[%c0_13, %c0_14] : memref<32x32xf32, #tpu.memory_space<vmem>>, vector<32x32xf32>
    %c0_15 = arith.constant 0 : index
    %c0_16 = arith.constant 0 : index
    %8 = vector.load %arg11[%c0_15, %c0_16] : memref<1x32xf32, #tpu.memory_space<vmem>>, vector<1x32xf32>
    %c0_17 = arith.constant 0 : index
    %c0_18 = arith.constant 0 : index
    %9 = vector.load %arg12[%c0_17, %c0_18] : memref<32x32xf32, #tpu.memory_space<vmem>>, vector<32x32xf32>
    %c0_19 = arith.constant 0 : index
    %c0_20 = arith.constant 0 : index
    %10 = vector.load %arg13[%c0_19, %c0_20] : memref<1x32xf32, #tpu.memory_space<vmem>>, vector<1x32xf32>
    %c0_21 = arith.constant 0 : index
    %c0_22 = arith.constant 0 : index
    %11 = vector.load %arg14[%c0_21, %c0_22] : memref<1x32xf32, #tpu.memory_space<vmem>>, vector<1x32xf32>
    %c0_23 = arith.constant 0 : index
    %c0_24 = arith.constant 0 : index
    %12 = vector.load %arg15[%c0_23, %c0_24] : memref<1x1xf32, #tpu.memory_space<vmem>>, vector<1x1xf32>
    %c0_25 = arith.constant 0 : index
    %c0_26 = arith.constant 0 : index
    %13 = vector.load %arg2[%c0_25, %c0_26] : memref<2x4xf32, #tpu.memory_space<vmem>>, vector<2x4xf32>
    %cst = arith.constant 0.000000e+00 : f32
    %14 = vector.broadcast %cst : f32 to vector<2x1xf32>
    %c0_27 = arith.constant 0 : index
    %c0_28 = arith.constant 0 : index
    %c0_29 = arith.constant 0 : index
    %15 = vector.load %arg1[%c0_27, %c0_28, %c0_29] : memref<2x2x32xf32, #tpu.memory_space<vmem>>, vector<1x2x32xf32>
    %16 = vector.shape_cast %15 : vector<1x2x32xf32> to vector<2x32xf32>
    %cst_30 = arith.constant dense<0.000000e+00> : vector<2x32xf32>
    %17 = tpu.matmul %16, %0, %cst_30 {dimension_numbers = #tpu.dot_dimension_numbers<[1], [0], [0], [1], [0, 0, 1, 1], [], []>} : vector<2x32xf32>, vector<32x32xf32>, vector<2x32xf32> -> vector<2x32xf32>
    %18 = vector.broadcast %1 : vector<1x32xf32> to vector<2x32xf32>
    %19 = arith.addf %17, %18 : vector<2x32xf32>
    %cst_31 = arith.constant 0.000000e+00 : f32
    %20 = vector.broadcast %cst_31 : f32 to vector<2x32xf32>
    %21 = arith.maximumf %19, %20 : vector<2x32xf32>
    %cst_32 = arith.constant dense<0.000000e+00> : vector<2x32xf32>
    %22 = tpu.matmul %21, %2, %cst_32 {dimension_numbers = #tpu.dot_dimension_numbers<[1], [0], [0], [1], [0, 0, 1, 1], [], []>} : vector<2x32xf32>, vector<32x32xf32>, vector<2x32xf32> -> vector<2x32xf32>
    %23 = vector.broadcast %3 : vector<1x32xf32> to vector<2x32xf32>
    %24 = arith.addf %22, %23 : vector<2x32xf32>
    %cst_33 = arith.constant 0.000000e+00 : f32
    %25 = vector.broadcast %cst_33 : f32 to vector<2x32xf32>
    %26 = arith.maximumf %24, %25 : vector<2x32xf32>
    %27 = vector.broadcast %4 : vector<1x32xf32> to vector<2x32xf32>
    %28 = arith.mulf %26, %27 : vector<2x32xf32>
    %cst_34 = arith.constant dense<0.000000e+00> : vector<2xf32>
    %29 = vector.multi_reduction <add>, %28, %cst_34 [1] : vector<2x32xf32> to vector<2xf32>
    %30 = vector.shape_cast %29 : vector<2xf32> to vector<2x1xf32>
    %31 = arith.addf %14, %30 : vector<2x1xf32>
    %32 = vector.broadcast %5 : vector<1x1xf32> to vector<2x1xf32>
    %33 = arith.addf %31, %32 : vector<2x1xf32>
    %cst_35 = arith.constant dense<0.000000e+00> : vector<2x32xf32>
    %34 = tpu.matmul %16, %6, %cst_35 {dimension_numbers = #tpu.dot_dimension_numbers<[1], [0], [0], [1], [0, 0, 1, 1], [], []>} : vector<2x32xf32>, vector<32x32xf32>, vector<2x32xf32> -> vector<2x32xf32>
    %cst_36 = arith.constant dense<0.000000e+00> : vector<2x32xf32>
    %35 = tpu.matmul %16, %7, %cst_36 {dimension_numbers = #tpu.dot_dimension_numbers<[1], [0], [0], [1], [0, 0, 1, 1], [], []>} : vector<2x32xf32>, vector<32x32xf32>, vector<2x32xf32> -> vector<2x32xf32>
    %36 = vector.broadcast %8 : vector<1x32xf32> to vector<2x32xf32>
    %37 = arith.addf %35, %36 : vector<2x32xf32>
    %c1 = arith.constant 1 : index
    %c0_37 = arith.constant 0 : index
    %c0_38 = arith.constant 0 : index
    %38 = vector.load %arg1[%c1, %c0_37, %c0_38] : memref<2x2x32xf32, #tpu.memory_space<vmem>>, vector<1x2x32xf32>
    %39 = vector.shape_cast %38 : vector<1x2x32xf32> to vector<2x32xf32>
    %cst_39 = arith.constant dense<0.000000e+00> : vector<2x32xf32>
    %40 = tpu.matmul %39, %0, %cst_39 {dimension_numbers = #tpu.dot_dimension_numbers<[1], [0], [0], [1], [0, 0, 1, 1], [], []>} : vector<2x32xf32>, vector<32x32xf32>, vector<2x32xf32> -> vector<2x32xf32>
    %41 = vector.broadcast %1 : vector<1x32xf32> to vector<2x32xf32>
    %42 = arith.addf %40, %41 : vector<2x32xf32>
    %cst_40 = arith.constant 0.000000e+00 : f32
    %43 = vector.broadcast %cst_40 : f32 to vector<2x32xf32>
    %44 = arith.maximumf %42, %43 : vector<2x32xf32>
    %cst_41 = arith.constant dense<0.000000e+00> : vector<2x32xf32>
    %45 = tpu.matmul %44, %2, %cst_41 {dimension_numbers = #tpu.dot_dimension_numbers<[1], [0], [0], [1], [0, 0, 1, 1], [], []>} : vector<2x32xf32>, vector<32x32xf32>, vector<2x32xf32> -> vector<2x32xf32>
    %46 = vector.broadcast %3 : vector<1x32xf32> to vector<2x32xf32>
    %47 = arith.addf %45, %46 : vector<2x32xf32>
    %cst_42 = arith.constant 0.000000e+00 : f32
    %48 = vector.broadcast %cst_42 : f32 to vector<2x32xf32>
    %49 = arith.maximumf %47, %48 : vector<2x32xf32>
    %50 = vector.broadcast %4 : vector<1x32xf32> to vector<2x32xf32>
    %51 = arith.mulf %49, %50 : vector<2x32xf32>
    %cst_43 = arith.constant dense<0.000000e+00> : vector<2xf32>
    %52 = vector.multi_reduction <add>, %51, %cst_43 [1] : vector<2x32xf32> to vector<2xf32>
    %53 = vector.shape_cast %52 : vector<2xf32> to vector<2x1xf32>
    %54 = arith.addf %33, %53 : vector<2x1xf32>
    %55 = vector.broadcast %5 : vector<1x1xf32> to vector<2x1xf32>
    %56 = arith.addf %54, %55 : vector<2x1xf32>
    %cst_44 = arith.constant dense<0.000000e+00> : vector<2x32xf32>
    %57 = tpu.matmul %39, %6, %cst_44 {dimension_numbers = #tpu.dot_dimension_numbers<[1], [0], [0], [1], [0, 0, 1, 1], [], []>} : vector<2x32xf32>, vector<32x32xf32>, vector<2x32xf32> -> vector<2x32xf32>
    %cst_45 = arith.constant dense<0.000000e+00> : vector<2x32xf32>
    %58 = tpu.matmul %39, %7, %cst_45 {dimension_numbers = #tpu.dot_dimension_numbers<[1], [0], [0], [1], [0, 0, 1, 1], [], []>} : vector<2x32xf32>, vector<32x32xf32>, vector<2x32xf32> -> vector<2x32xf32>
    %59 = vector.broadcast %8 : vector<1x32xf32> to vector<2x32xf32>
    %60 = arith.addf %58, %59 : vector<2x32xf32>
    %61 = arith.addf %34, %37 : vector<2x32xf32>
    %cst_46 = arith.constant 0.000000e+00 : f32
    %62 = vector.broadcast %cst_46 : f32 to vector<2x32xf32>
    %63 = arith.maximumf %61, %62 : vector<2x32xf32>
    %cst_47 = arith.constant dense<0.000000e+00> : vector<2x32xf32>
    %64 = tpu.matmul %63, %9, %cst_47 {dimension_numbers = #tpu.dot_dimension_numbers<[1], [0], [0], [1], [0, 0, 1, 1], [], []>} : vector<2x32xf32>, vector<32x32xf32>, vector<2x32xf32> -> vector<2x32xf32>
    %65 = vector.broadcast %10 : vector<1x32xf32> to vector<2x32xf32>
    %66 = arith.addf %64, %65 : vector<2x32xf32>
    %cst_48 = arith.constant 0.000000e+00 : f32
    %67 = vector.broadcast %cst_48 : f32 to vector<2x32xf32>
    %68 = arith.maximumf %66, %67 : vector<2x32xf32>
    %69 = vector.broadcast %11 : vector<1x32xf32> to vector<2x32xf32>
    %70 = arith.mulf %68, %69 : vector<2x32xf32>
    %cst_49 = arith.constant dense<0.000000e+00> : vector<2xf32>
    %71 = vector.multi_reduction <add>, %70, %cst_49 [1] : vector<2x32xf32> to vector<2xf32>
    %72 = vector.shape_cast %71 : vector<2xf32> to vector<2x1xf32>
    %73 = vector.broadcast %12 : vector<1x1xf32> to vector<2x1xf32>
    %74 = arith.addf %72, %73 : vector<2x1xf32>
    %75 = vector.extract_strided_slice %13 {offsets = [0, 0], sizes = [2, 1], strides = [1, 1]} : vector<2x4xf32> to vector<2x1xf32>
    %76 = arith.mulf %75, %74 : vector<2x1xf32>
    %77 = arith.addf %56, %76 : vector<2x1xf32>
    %78 = arith.addf %34, %60 : vector<2x32xf32>
    %cst_50 = arith.constant 0.000000e+00 : f32
    %79 = vector.broadcast %cst_50 : f32 to vector<2x32xf32>
    %80 = arith.maximumf %78, %79 : vector<2x32xf32>
    %cst_51 = arith.constant dense<0.000000e+00> : vector<2x32xf32>
    %81 = tpu.matmul %80, %9, %cst_51 {dimension_numbers = #tpu.dot_dimension_numbers<[1], [0], [0], [1], [0, 0, 1, 1], [], []>} : vector<2x32xf32>, vector<32x32xf32>, vector<2x32xf32> -> vector<2x32xf32>
    %82 = vector.broadcast %10 : vector<1x32xf32> to vector<2x32xf32>
    %83 = arith.addf %81, %82 : vector<2x32xf32>
    %cst_52 = arith.constant 0.000000e+00 : f32
    %84 = vector.broadcast %cst_52 : f32 to vector<2x32xf32>
    %85 = arith.maximumf %83, %84 : vector<2x32xf32>
    %86 = vector.broadcast %11 : vector<1x32xf32> to vector<2x32xf32>
    %87 = arith.mulf %85, %86 : vector<2x32xf32>
    %cst_53 = arith.constant dense<0.000000e+00> : vector<2xf32>
    %88 = vector.multi_reduction <add>, %87, %cst_53 [1] : vector<2x32xf32> to vector<2xf32>
    %89 = vector.shape_cast %88 : vector<2xf32> to vector<2x1xf32>
    %90 = vector.broadcast %12 : vector<1x1xf32> to vector<2x1xf32>
    %91 = arith.addf %89, %90 : vector<2x1xf32>
    %92 = vector.extract_strided_slice %13 {offsets = [0, 1], sizes = [2, 1], strides = [1, 1]} : vector<2x4xf32> to vector<2x1xf32>
    %93 = arith.mulf %92, %91 : vector<2x1xf32>
    %94 = arith.addf %77, %93 : vector<2x1xf32>
    %95 = arith.addf %57, %37 : vector<2x32xf32>
    %cst_54 = arith.constant 0.000000e+00 : f32
    %96 = vector.broadcast %cst_54 : f32 to vector<2x32xf32>
    %97 = arith.maximumf %95, %96 : vector<2x32xf32>
    %cst_55 = arith.constant dense<0.000000e+00> : vector<2x32xf32>
    %98 = tpu.matmul %97, %9, %cst_55 {dimension_numbers = #tpu.dot_dimension_numbers<[1], [0], [0], [1], [0, 0, 1, 1], [], []>} : vector<2x32xf32>, vector<32x32xf32>, vector<2x32xf32> -> vector<2x32xf32>
    %99 = vector.broadcast %10 : vector<1x32xf32> to vector<2x32xf32>
    %100 = arith.addf %98, %99 : vector<2x32xf32>
    %cst_56 = arith.constant 0.000000e+00 : f32
    %101 = vector.broadcast %cst_56 : f32 to vector<2x32xf32>
    %102 = arith.maximumf %100, %101 : vector<2x32xf32>
    %103 = vector.broadcast %11 : vector<1x32xf32> to vector<2x32xf32>
    %104 = arith.mulf %102, %103 : vector<2x32xf32>
    %cst_57 = arith.constant dense<0.000000e+00> : vector<2xf32>
    %105 = vector.multi_reduction <add>, %104, %cst_57 [1] : vector<2x32xf32> to vector<2xf32>
    %106 = vector.shape_cast %105 : vector<2xf32> to vector<2x1xf32>
    %107 = vector.broadcast %12 : vector<1x1xf32> to vector<2x1xf32>
    %108 = arith.addf %106, %107 : vector<2x1xf32>
    %109 = vector.extract_strided_slice %13 {offsets = [0, 2], sizes = [2, 1], strides = [1, 1]} : vector<2x4xf32> to vector<2x1xf32>
    %110 = arith.mulf %109, %108 : vector<2x1xf32>
    %111 = arith.addf %94, %110 : vector<2x1xf32>
    %112 = arith.addf %57, %60 : vector<2x32xf32>
    %cst_58 = arith.constant 0.000000e+00 : f32
    %113 = vector.broadcast %cst_58 : f32 to vector<2x32xf32>
    %114 = arith.maximumf %112, %113 : vector<2x32xf32>
    %cst_59 = arith.constant dense<0.000000e+00> : vector<2x32xf32>
    %115 = tpu.matmul %114, %9, %cst_59 {dimension_numbers = #tpu.dot_dimension_numbers<[1], [0], [0], [1], [0, 0, 1, 1], [], []>} : vector<2x32xf32>, vector<32x32xf32>, vector<2x32xf32> -> vector<2x32xf32>
    %116 = vector.broadcast %10 : vector<1x32xf32> to vector<2x32xf32>
    %117 = arith.addf %115, %116 : vector<2x32xf32>
    %cst_60 = arith.constant 0.000000e+00 : f32
    %118 = vector.broadcast %cst_60 : f32 to vector<2x32xf32>
    %119 = arith.maximumf %117, %118 : vector<2x32xf32>
    %120 = vector.broadcast %11 : vector<1x32xf32> to vector<2x32xf32>
    %121 = arith.mulf %119, %120 : vector<2x32xf32>
    %cst_61 = arith.constant dense<0.000000e+00> : vector<2xf32>
    %122 = vector.multi_reduction <add>, %121, %cst_61 [1] : vector<2x32xf32> to vector<2xf32>
    %123 = vector.shape_cast %122 : vector<2xf32> to vector<2x1xf32>
    %124 = vector.broadcast %12 : vector<1x1xf32> to vector<2x1xf32>
    %125 = arith.addf %123, %124 : vector<2x1xf32>
    %126 = vector.extract_strided_slice %13 {offsets = [0, 3], sizes = [2, 1], strides = [1, 1]} : vector<2x4xf32> to vector<2x1xf32>
    %127 = arith.mulf %126, %125 : vector<2x1xf32>
    %128 = arith.addf %111, %127 : vector<2x1xf32>
    %c0_62 = arith.constant 0 : index
    %c0_63 = arith.constant 0 : index
    %129 = vector.load %arg16[%c0_62, %c0_63] : memref<2x1xf32, #tpu.memory_space<vmem>>, vector<2x1xf32>
    tpu.vector_store %arg16[%c0_62, %c0_63], %128 {strides = array<i32>} : memref<2x1xf32, #tpu.memory_space<vmem>>, vector<2x1xf32>,
    return
  }
  func.func @transform_0(%arg0: i32) -> (i32, i32, i32) {
    %c0_i32 = arith.constant 0 : i32
    %c0_i32_0 = arith.constant 0 : i32
    %c0_i32_1 = arith.constant 0 : i32
    return %c0_i32, %arg0, %c0_i32_0 : i32, i32, i32
  }
  func.func @transform_1(%arg0: i32) -> (i32, i32) {
    %c0_i32 = arith.constant 0 : i32
    %c0_i32_0 = arith.constant 0 : i32
    return %arg0, %c0_i32 : i32, i32
  }
  func.func @transform_2(%arg0: i32) -> (i32, i32) {
    %c0_i32 = arith.constant 0 : i32
    %c0_i32_0 = arith.constant 0 : i32
    %c0_i32_1 = arith.constant 0 : i32
    return %c0_i32, %c0_i32_0 : i32, i32
  }
  func.func @transform_3(%arg0: i32) -> (i32, i32) {
    %c0_i32 = arith.constant 0 : i32
    %c0_i32_0 = arith.constant 0 : i32
    %c0_i32_1 = arith.constant 0 : i32
    return %c0_i32, %c0_i32_0 : i32, i32
  }
  func.func @transform_4(%arg0: i32) -> (i32, i32) {
    %c0_i32 = arith.constant 0 : i32
    %c0_i32_0 = arith.constant 0 : i32
    %c0_i32_1 = arith.constant 0 : i32
    return %c0_i32, %c0_i32_0 : i32, i32
  }
  func.func @transform_5(%arg0: i32) -> (i32, i32) {
    %c0_i32 = arith.constant 0 : i32
    %c0_i32_0 = arith.constant 0 : i32
    %c0_i32_1 = arith.constant 0 : i32
    return %c0_i32, %c0_i32_0 : i32, i32
  }
  func.func @transform_6(%arg0: i32) -> (i32, i32) {
    %c0_i32 = arith.constant 0 : i32
    %c0_i32_0 = arith.constant 0 : i32
    %c0_i32_1 = arith.constant 0 : i32
    return %c0_i32, %c0_i32_0 : i32, i32
  }
  func.func @transform_7(%arg0: i32) -> (i32, i32) {
    %c0_i32 = arith.constant 0 : i32
    %c0_i32_0 = arith.constant 0 : i32
    %c0_i32_1 = arith.constant 0 : i32
    return %c0_i32, %c0_i32_0 : i32, i32
  }
  func.func @transform_8(%arg0: i32) -> (i32, i32) {
    %c0_i32 = arith.constant 0 : i32
    %c0_i32_0 = arith.constant 0 : i32
    %c0_i32_1 = arith.constant 0 : i32
    return %c0_i32, %c0_i32_0 : i32, i32
  }
  func.func @transform_9(%arg0: i32) -> (i32, i32) {
    %c0_i32 = arith.constant 0 : i32
    %c0_i32_0 = arith.constant 0 : i32
    %c0_i32_1 = arith.constant 0 : i32
    return %c0_i32, %c0_i32_0 : i32, i32
  }
  func.func @transform_10(%arg0: i32) -> (i32, i32) {
    %c0_i32 = arith.constant 0 : i32
    %c0_i32_0 = arith.constant 0 : i32
    %c0_i32_1 = arith.constant 0 : i32
    return %c0_i32, %c0_i32_0 : i32, i32
  }
  func.func @transform_11(%arg0: i32) -> (i32, i32) {
    %c0_i32 = arith.constant 0 : i32
    %c0_i32_0 = arith.constant 0 : i32
    %c0_i32_1 = arith.constant 0 : i32
    return %c0_i32, %c0_i32_0 : i32, i32
  }
  func.func @transform_12(%arg0: i32) -> (i32, i32) {
    %c0_i32 = arith.constant 0 : i32
    %c0_i32_0 = arith.constant 0 : i32
    %c0_i32_1 = arith.constant 0 : i32
    return %c0_i32, %c0_i32_0 : i32, i32
  }
  func.func @transform_13(%arg0: i32) -> (i32, i32) {
    %c0_i32 = arith.constant 0 : i32
    %c0_i32_0 = arith.constant 0 : i32
    %c0_i32_1 = arith.constant 0 : i32
    return %c0_i32, %c0_i32_0 : i32, i32
  }
  func.func @transform_14(%arg0: i32) -> (i32, i32) {
    %c0_i32 = arith.constant 0 : i32
    %c0_i32_0 = arith.constant 0 : i32
    %c0_i32_1 = arith.constant 0 : i32
    return %c0_i32, %c0_i32_0 : i32, i32
  }
  func.func @transform_15(%arg0: i32) -> (i32, i32) {
    %c0_i32 = arith.constant 0 : i32
    %c0_i32_0 = arith.constant 0 : i32
    return %arg0, %c0_i32 : i32, i32
  }
}

</mosaic_0001>

<llo_original>
// kernel: tpu_custom_call.1
$region0: #{tpu_custom_call.1}
  #allocation0 [shape = 'u32[]', space=smem, size = 0x4, offset = 0x4, fixed_abs, tag = 'smem constant byte address 0x4 - core index']
  #allocation1 [shape = 'u32[144,128]{1,0:T(1,128)}', space=vmem, size = 0x12000, scoped, tag = 'internal scratch']
  #allocation2 [shape = 'f32[1,1]{1,0:T(1,128)S(1)}', space=vmem, size = 0x200, scoped, tag = 'scoped memory for tpu_custom_call.1']
  #allocation3 [shape = 'f32[1,1]{1,0:T(1,128)S(1)}', space=vmem, size = 0x200, scoped, tag = 'scoped memory for tpu_custom_call.1']
  %s0 = inlined_call_operand.hbm [shape: f32[2,2,32], index: 0, kind: input, shape index: {}]
  %s1 = inlined_call_operand.vmem [shape: f32[2,4], index: 1, kind: input, shape index: {}]
  %s2 = inlined_call_operand.hbm [shape: f32[32,32], index: 2, kind: input, shape index: {}]
  %s3 = inlined_call_operand.hbm [shape: f32[1,32], index: 3, kind: input, shape index: {}]
  %s4 = inlined_call_operand.hbm [shape: f32[32,32], index: 4, kind: input, shape index: {}]
  %s5 = inlined_call_operand.hbm [shape: f32[1,32], index: 5, kind: input, shape index: {}]
  %s6 = inlined_call_operand.hbm [shape: f32[1,32], index: 6, kind: input, shape index: {}]
  %s7 = inlined_call_operand.<no memory space> [shape: f32[1,1], index: 7, kind: input, shape index: {}]
  %s8 = inlined_call_operand.vmem [shape: f32[32,32], index: 8, kind: input, shape index: {}]
  %s9 = inlined_call_operand.hbm [shape: f32[32,32], index: 9, kind: input, shape index: {}]
  %s10 = inlined_call_operand.vmem [shape: f32[1,32], index: 10, kind: input, shape index: {}]
  %s11 = inlined_call_operand.hbm [shape: f32[32,32], index: 11, kind: input, shape index: {}]
  %s12 = inlined_call_operand.vmem [shape: f32[1,32], index: 12, kind: input, shape index: {}]
  %s13 = inlined_call_operand.vmem [shape: f32[1,32], index: 13, kind: input, shape index: {}]
  %s14 = inlined_call_operand.<no memory space> [shape: f32[1,1], index: 14, kind: input, shape index: {}]
  %s15 = inlined_call_operand.vmem [shape: f32[2,1], index: 15, kind: output, shape index: {}]
  %s16 = sld [smem:[#allocation0]]
  $region102: #{tpu_custom_call.1} parent=0
    _
  %s18 = ssub.s32 1, %s16
  %s19 = scalar_select 0, %s18, %s16
  %v20 = vstv %s7
  %21 = vst [vmem:[#allocation2] sm:$0x1] %v20
  %v22 = vstv %s14
  %23 = vst [vmem:[#allocation3] sm:$0x1] %v22
  $region1: #{tpu_custom_call.1} parent=0
    #allocation4 [shape = 'u8[2048]{0}', space=vmem, size = 0x800, scoped, tag = 'input window, operand 0, single buffered']
    #allocation5 [shape = 's32[1]{0}', space=sflag, size = 0x4, scoped, tag = 'scoped memory for tpu_custom_call.1']
    #allocation6 [shape = 'u8[16384]{0}', space=vmem, size = 0x4000, scoped, tag = 'input window, operand 2, single buffered']
    #allocation7 [shape = 's32[1]{0}', space=sflag, size = 0x4, scoped, tag = 'scoped memory for tpu_custom_call.1']
    #allocation8 [shape = 'u8[512]{0}', space=vmem, size = 0x400, scoped, tag = 'input window, operand 3, single buffered']
    #allocation9 [shape = 'u8[16384]{0}', space=vmem, size = 0x4000, scoped, tag = 'input window, operand 4, single buffered']
    #allocation10 [shape = 's32[1]{0}', space=sflag, size = 0x4, scoped, tag = 'scoped memory for tpu_custom_call.1']
    #allocation11 [shape = 'u8[512]{0}', space=vmem, size = 0x400, scoped, tag = 'input window, operand 5, single buffered']
    #allocation12 [shape = 'u8[512]{0}', space=vmem, size = 0x400, scoped, tag = 'input window, operand 6, single buffered']
    #allocation13 [shape = 's32[1]{0}', space=sflag, size = 0x4, scoped, tag = 'scoped memory for tpu_custom_call.1']
    #allocation14 [shape = 'u8[16384]{0}', space=vmem, size = 0x4000, scoped, tag = 'input window, operand 9, single buffered']
    #allocation15 [shape = 'u8[16384]{0}', space=vmem, size = 0x4000, scoped, tag = 'input window, operand 11, single buffered']
    #allocation16 [shape = 's32[1]{0}', space=sflag, size = 0x4, scoped, tag = 'scoped memory for tpu_custom_call.1']
    %24 = vsyncpa [#allocation5], 0
    %25 = vsyncpa [#allocation7], 0
    %26 = vsyncpa [#allocation10], 0
    %27 = vsyncpa [#allocation13], 0
    %28 = vsyncpa [#allocation16], 0
    // Predicated region
    $region2: #{tpu_custom_call.1} parent=1 // pred_check
      _
    $region3: #{tpu_custom_call.1} parent=1 // pred_check_branch
      %30 = sbr.rel (0) target = $region5
    $region4: #{tpu_custom_call.1} parent=1 // pred_region
      %s32 = ssub.s32 64, 64
      %33 = vsyncadd [#allocation5], %s32
      %s34 = sshll.u32 [#allocation4], 4
      %s35 = int_to_ptr.vmem [resolvable:$true] %s34
      %40 = dma.hbm_to_vmem [thread:$0]  %s0, 64, %s35, [#allocation5], 32, 32, 2
    $region5: #{tpu_custom_call.1} parent=1 // pred_fallthru
      _
    // Predicated region
    $region6: #{tpu_custom_call.1} parent=1 // pred_check
      _
    $region7: #{tpu_custom_call.1} parent=1 // pred_check_branch
      %42 = sbr.rel (0) target = $region9
    $region8: #{tpu_custom_call.1} parent=1 // pred_region
      _
    $region9: #{tpu_custom_call.1} parent=1 // pred_fallthru
      _
    // Predicated region
    $region10: #{tpu_custom_call.1} parent=1 // pred_check
      _
    $region11: #{tpu_custom_call.1} parent=1 // pred_check_branch
      %44 = sbr.rel (0) target = $region13
    $region12: #{tpu_custom_call.1} parent=1 // pred_region
      %s46 = ssub.s32 512, 512
      %47 = vsyncadd [#allocation7], %s46
      %s48 = sshll.u32 [#allocation6], 4
      %s49 = int_to_ptr.vmem [resolvable:$true] %s48
      %54 = dma.hbm_to_vmem [thread:$0]  %s2, 512, %s49, [#allocation7], 128, 128, 8
    $region13: #{tpu_custom_call.1} parent=1 // pred_fallthru
      _
    // Predicated region
    $region14: #{tpu_custom_call.1} parent=1 // pred_check
      _
    $region15: #{tpu_custom_call.1} parent=1 // pred_check_branch
      %56 = sbr.rel (0) target = $region17
    $region16: #{tpu_custom_call.1} parent=1 // pred_region
      %s58 = ssub.s32 16, 16
      %59 = vsyncadd [#allocation7], %s58
      %s61 = sshll.u32 [#allocation8], 4
      %s62 = int_to_ptr.vmem [resolvable:$true] %s61
      %64 = dma.hbm_to_vmem [thread:$0]  %s3, 16, %s62, [#allocation7]
    $region17: #{tpu_custom_call.1} parent=1 // pred_fallthru
      _
    // Predicated region
    $region18: #{tpu_custom_call.1} parent=1 // pred_check
      _
    $region19: #{tpu_custom_call.1} parent=1 // pred_check_branch
      %66 = sbr.rel (0) target = $region21
    $region20: #{tpu_custom_call.1} parent=1 // pred_region
      %s68 = ssub.s32 512, 512
      %69 = vsyncadd [#allocation10], %s68
      %s70 = sshll.u32 [#allocation9], 4
      %s71 = int_to_ptr.vmem [resolvable:$true] %s70
      %76 = dma.hbm_to_vmem [thread:$0]  %s4, 512, %s71, [#allocation10], 128, 128, 8
    $region21: #{tpu_custom_call.1} parent=1 // pred_fallthru
      _
    // Predicated region
    $region22: #{tpu_custom_call.1} parent=1 // pred_check
      _
    $region23: #{tpu_custom_call.1} parent=1 // pred_check_branch
      %78 = sbr.rel (0) target = $region25
    $region24: #{tpu_custom_call.1} parent=1 // pred_region
      %s80 = ssub.s32 16, 16
      %81 = vsyncadd [#allocation10], %s80
      %s83 = sshll.u32 [#allocation11], 4
      %s84 = int_to_ptr.vmem [resolvable:$true] %s83
      %86 = dma.hbm_to_vmem [thread:$0]  %s5, 16, %s84, [#allocation10]
    $region25: #{tpu_custom_call.1} parent=1 // pred_fallthru
      _
    // Predicated region
    $region26: #{tpu_custom_call.1} parent=1 // pred_check
      _
    $region27: #{tpu_custom_call.1} parent=1 // pred_check_branch
      %88 = sbr.rel (0) target = $region29
    $region28: #{tpu_custom_call.1} parent=1 // pred_region
      %s90 = ssub.s32 16, 16
      %91 = vsyncadd [#allocation13], %s90
      %s93 = sshll.u32 [#allocation12], 4
      %s94 = int_to_ptr.vmem [resolvable:$true] %s93
      %96 = dma.hbm_to_vmem [thread:$0]  %s6, 16, %s94, [#allocation13]
    $region29: #{tpu_custom_call.1} parent=1 // pred_fallthru
      _
    // Predicated region
    $region30: #{tpu_custom_call.1} parent=1 // pred_check
      _
    $region31: #{tpu_custom_call.1} parent=1 // pred_check_branch
      %98 = sbr.rel (0) target = $region33
    $region32: #{tpu_custom_call.1} parent=1 // pred_region
      _
    $region33: #{tpu_custom_call.1} parent=1 // pred_fallthru
      _
    // Predicated region
    $region34: #{tpu_custom_call.1} parent=1 // pred_check
      _
    $region35: #{tpu_custom_call.1} parent=1 // pred_check_branch
      %100 = sbr.rel (0) target = $region37
    $region36: #{tpu_custom_call.1} parent=1 // pred_region
      _
    $region37: #{tpu_custom_call.1} parent=1 // pred_fallthru
      _
    // Predicated region
    $region38: #{tpu_custom_call.1} parent=1 // pred_check
      _
    $region39: #{tpu_custom_call.1} parent=1 // pred_check_branch
      %102 = sbr.rel (0) target = $region41
    $region40: #{tpu_custom_call.1} parent=1 // pred_region
      %s104 = ssub.s32 512, 512
      %105 = vsyncadd [#allocation13], %s104
      %s106 = sshll.u32 [#allocation14], 4
      %s107 = int_to_ptr.vmem [resolvable:$true] %s106
      %112 = dma.hbm_to_vmem [thread:$0]  %s9, 512, %s107, [#allocation13], 128, 128, 8
    $region41: #{tpu_custom_call.1} parent=1 // pred_fallthru
      _
    // Predicated region
    $region42: #{tpu_custom_call.1} parent=1 // pred_check
      _
    $region43: #{tpu_custom_call.1} parent=1 // pred_check_branch
      %114 = sbr.rel (0) target = $region45
    $region44: #{tpu_custom_call.1} parent=1 // pred_region
      _
    $region45: #{tpu_custom_call.1} parent=1 // pred_fallthru
      _
    // Predicated region
    $region46: #{tpu_custom_call.1} parent=1 // pred_check
      _
    $region47: #{tpu_custom_call.1} parent=1 // pred_check_branch
      %116 = sbr.rel (0) target = $region49
    $region48: #{tpu_custom_call.1} parent=1 // pred_region
      %s118 = ssub.s32 512, 512
      %119 = vsyncadd [#allocation16], %s118
      %s120 = sshll.u32 [#allocation15], 4
      %s121 = int_to_ptr.vmem [resolvable:$true] %s120
      %126 = dma.hbm_to_vmem [thread:$0]  %s11, 512, %s121, [#allocation16], 128, 128, 8
    $region49: #{tpu_custom_call.1} parent=1 // pred_fallthru
      _
    // Predicated region
    $region50: #{tpu_custom_call.1} parent=1 // pred_check
      _
    $region51: #{tpu_custom_call.1} parent=1 // pred_check_branch
      %128 = sbr.rel (0) target = $region53
    $region52: #{tpu_custom_call.1} parent=1 // pred_region
      _
    $region53: #{tpu_custom_call.1} parent=1 // pred_fallthru
      _
    // Predicated region
    $region54: #{tpu_custom_call.1} parent=1 // pred_check
      _
    $region55: #{tpu_custom_call.1} parent=1 // pred_check_branch
      %130 = sbr.rel (0) target = $region57
    $region56: #{tpu_custom_call.1} parent=1 // pred_region
      _
    $region57: #{tpu_custom_call.1} parent=1 // pred_fallthru
      _
    // Predicated region
    $region58: #{tpu_custom_call.1} parent=1 // pred_check
      _
    $region59: #{tpu_custom_call.1} parent=1 // pred_check_branch
      %132 = sbr.rel (0) target = $region61
    $region60: #{tpu_custom_call.1} parent=1 // pred_region
      _
    $region61: #{tpu_custom_call.1} parent=1 // pred_fallthru
      _
    // Predicated region
    $region62: #{tpu_custom_call.1} parent=1 // pred_check
      _
    $region63: #{tpu_custom_call.1} parent=1 // pred_check_branch
      %134 = sbr.rel (0) target = $region65
    $region64: #{tpu_custom_call.1} parent=1 // pred_region
      %135 = dma.done [#allocation5], 64
    $region65: #{tpu_custom_call.1} parent=1 // pred_fallthru
      _
    // Predicated region
    $region66: #{tpu_custom_call.1} parent=1 // pred_check
      _
    $region67: #{tpu_custom_call.1} parent=1 // pred_check_branch
      %137 = sbr.rel (0) target = $region69
    $region68: #{tpu_custom_call.1} parent=1 // pred_region
      %138 = dma.done [#allocation7], 512
    $region69: #{tpu_custom_call.1} parent=1 // pred_fallthru
      _
    // Predicated region
    $region70: #{tpu_custom_call.1} parent=1 // pred_check
      _
    $region71: #{tpu_custom_call.1} parent=1 // pred_check_branch
      %140 = sbr.rel (0) target = $region73
    $region72: #{tpu_custom_call.1} parent=1 // pred_region
      %141 = dma.done [#allocation7], 16
    $region73: #{tpu_custom_call.1} parent=1 // pred_fallthru
      _
    // Predicated region
    $region74: #{tpu_custom_call.1} parent=1 // pred_check
      _
    $region75: #{tpu_custom_call.1} parent=1 // pred_check_branch
      %143 = sbr.rel (0) target = $region77
    $region76: #{tpu_custom_call.1} parent=1 // pred_region
      %144 = dma.done [#allocation10], 512
    $region77: #{tpu_custom_call.1} parent=1 // pred_fallthru
      _
    // Predicated region
    $region78: #{tpu_custom_call.1} parent=1 // pred_check
      _
    $region79: #{tpu_custom_call.1} parent=1 // pred_check_branch
      %146 = sbr.rel (0) target = $region81
    $region80: #{tpu_custom_call.1} parent=1 // pred_region
      %147 = dma.done [#allocation10], 16
    $region81: #{tpu_custom_call.1} parent=1 // pred_fallthru
      _
    // Predicated region
    $region82: #{tpu_custom_call.1} parent=1 // pred_check
      _
    $region83: #{tpu_custom_call.1} parent=1 // pred_check_branch
      %149 = sbr.rel (0) target = $region85
    $region84: #{tpu_custom_call.1} parent=1 // pred_region
      %150 = dma.done [#allocation13], 16
    $region85: #{tpu_custom_call.1} parent=1 // pred_fallthru
      _
    // Predicated region
    $region86: #{tpu_custom_call.1} parent=1 // pred_check
      _
    $region87: #{tpu_custom_call.1} parent=1 // pred_check_branch
      %152 = sbr.rel (0) target = $region89
    $region88: #{tpu_custom_call.1} parent=1 // pred_region
      %153 = dma.done [#allocation13], 512
    $region89: #{tpu_custom_call.1} parent=1 // pred_fallthru
      _
    // Predicated region
    $region90: #{tpu_custom_call.1} parent=1 // pred_check
      _
    $region91: #{tpu_custom_call.1} parent=1 // pred_check_branch
      %155 = sbr.rel (0) target = $region93
    $region92: #{tpu_custom_call.1} parent=1 // pred_region
      %156 = dma.done [#allocation16], 512
    $region93: #{tpu_custom_call.1} parent=1 // pred_fallthru
      _
    %v157 = vld [vmem:[#allocation6] sm:$0xff]
    %v158 = vld [vmem:[#allocation6 + $0x8] sm:$0xff]
    %v159 = vld [vmem:[#allocation6 + $0x10] sm:$0xff]
    %v160 = vld [vmem:[#allocation6 + $0x18] sm:$0xff]
    %v161 = vld [vmem:[#allocation8] sm:$0x1]
    %v162 = vld [vmem:[#allocation9] sm:$0xff]
    %v163 = vld [vmem:[#allocation9 + $0x8] sm:$0xff]
    %v164 = vld [vmem:[#allocation9 + $0x10] sm:$0xff]
    %v165 = vld [vmem:[#allocation9 + $0x18] sm:$0xff]
    %v166 = vld [vmem:[#allocation11] sm:$0x1]
    %v167 = vld [vmem:[#allocation12] sm:$0x1]
    %v168 = vld [vmem:[#allocation2] sm:$0x1]
    %v169 = vld [vmem:[%s8] sm:$0xff]
    %v170 = vld [vmem:[%s8 + $0x8] sm:$0xff]
    %v171 = vld [vmem:[%s8 + $0x10] sm:$0xff]
    %v172 = vld [vmem:[%s8 + $0x18] sm:$0xff]
    %v173 = vld [vmem:[#allocation14] sm:$0xff]
    %v174 = vld [vmem:[#allocation14 + $0x8] sm:$0xff]
    %v175 = vld [vmem:[#allocation14 + $0x10] sm:$0xff]
    %v176 = vld [vmem:[#allocation14 + $0x18] sm:$0xff]
    %v177 = vld [vmem:[%s10] sm:$0x1]
    %v178 = vld [vmem:[#allocation15] sm:$0xff]
    %v179 = vld [vmem:[#allocation15 + $0x8] sm:$0xff]
    %v180 = vld [vmem:[#allocation15 + $0x10] sm:$0xff]
    %v181 = vld [vmem:[#allocation15 + $0x18] sm:$0xff]
    %v182 = vld [vmem:[%s12] sm:$0x1]
    %v183 = vld [vmem:[%s13] sm:$0x1]
    %v184 = vld [vmem:[#allocation3] sm:$0x1]
    %v185 = vld [vmem:[%s1] sm:$0x3]
    %v186 = vld [vmem:[#allocation4] sm:$0x3]
    %v188 = vlaneseq
    %v189 = vshrl.u32 %v188, 7
    %v190 = vsub.s32 0, %v189
    %v191 = vrot.slane %v161, %v190
    %vm193 = vcmask 261120
    %v195 = vsel %vm193, %v186, 0
    %197 = vmatprep.subr.mxu0 0.0
    %198 = vmatpush1.msra.mxu0 %v157
    %199 = vmatprep.subr.mxu0 0.0
    %200 = vmatpush1.msra.mxu0 %v158
    %201 = vmatprep.subr.mxu0 0.0
    %202 = vmatpush1.msra.mxu0 %v159
    %203 = vmatprep.subr.mxu0 0.0
    %204 = vmatpush1.msra.mxu0 %v160
    %205 = vmatprep.subr.mxu0 0.0
    %206 = vmatpush1.msra.mxu0 0.0
    %207 = vmatprep.subr.mxu0 0.0
    %208 = vmatpush1.msra.mxu0 0.0
    %209 = vmatprep.subr.mxu0 0.0
    %210 = vmatpush1.msra.mxu0 0.0
    %211 = vmatprep.subr.mxu0 0.0
    %212 = vmatpush1.msra.mxu0 0.0
    %213 = vmatprep.subr.mxu0 0.0
    %214 = vmatpush1.msra.mxu0 0.0
    %215 = vmatprep.subr.mxu0 0.0
    %216 = vmatpush1.msra.mxu0 0.0
    %217 = vmatprep.subr.mxu0 0.0
    %218 = vmatpush1.msra.mxu0 0.0
    %219 = vmatprep.subr.mxu0 0.0
    %220 = vmatpush1.msra.mxu0 0.0
    %221 = vmatprep.subr.mxu0 0.0
    %222 = vmatpush1.msra.mxu0 0.0
    %223 = vmatprep.subr.mxu0 0.0
    %224 = vmatpush1.msra.mxu0 0.0
    %225 = vmatprep.subr.mxu0 0.0
    %226 = vmatpush1.msra.mxu0 0.0
    %227 = vmatprep.subr.mxu0 0.0
    %228 = vmatpush1.msra.mxu0 0.0
    %229 = vmatprep.subr.mxu0 0.0
    %230 = vmatpush1.msra.mxu0 0.0
    %231 = vmatprep.subr.mxu0 0.0
    %232 = vmatpush1.msra.mxu0 0.0
    %233 = vmatprep.subr.mxu0 0.0
    %234 = vmatpush1.msra.mxu0 0.0
    %235 = vmatprep.subr.mxu0 0.0
    %236 = vmatpush1.msra.mxu0 0.0
    %237 = vmatprep.subr.mxu0 0.0
    %238 = vmatpush1.msra.mxu0 0.0
    %239 = vmatprep.subr.mxu0 0.0
    %240 = vmatpush1.msra.mxu0 0.0
    %241 = vmatprep.subr.mxu0 0.0
    %242 = vmatpush1.msra.mxu0 0.0
    %243 = vmatprep.subr.mxu0 0.0
    %244 = vmatpush1.msra.mxu0 0.0
    %245 = vmatprep.subr.mxu0 0.0
    %246 = vmatpush1.msra.mxu0 0.0
    %247 = vmatprep.subr.mxu0 0.0
    %248 = vmatpush1.msra.mxu0 0.0
    %249 = vmatprep.subr.mxu0 0.0
    %250 = vmatpush1.msra.mxu0 0.0
    %251 = vmatprep.subr.mxu0 0.0
    %252 = vmatpush1.msra.mxu0 0.0
    %253 = vmatprep.subr.mxu0 0.0
    %254 = vmatpush1.msra.mxu0 0.0
    %255 = vmatprep.subr.mxu0 0.0
    %256 = vmatpush1.msra.mxu0 0.0
    %257 = vmatprep.subr.mxu0 0.0
    %258 = vmatpush1.msra.mxu0 0.0
    %259 = vmatprep.subr.mxu0 0.0
    %260 = vmatpush1.msra.mxu0 0.0
    %261 = vmatprep.mubr.f32.mxu0 0.0
    %262 = vmatmul.mubr.f32.gmra.mrb[0].mxu0 %v195
    %v263 = vpop.f32.mrb[0].mxu0
    %v264 = vadd.f32 %v191, %v263
    %v265 = vpop.f32.mrb[0].mxu0
    %266 = vdwg.mxu0
    %v267 = vmax.f32 %v264, 0.0
    %v269 = vlaneseq
    %v270 = vshrl.u32 %v269, 7
    %v271 = vsub.s32 0, %v270
    %v272 = vrot.slane %v166, %v271
    %v275 = vsel %vm193, %v267, 0
    %277 = vmatprep.subr.mxu0 0.0
    %278 = vmatpush1.msra.mxu0 %v162
    %279 = vmatprep.subr.mxu0 0.0
    %280 = vmatpush1.msra.mxu0 %v163
    %281 = vmatprep.subr.mxu0 0.0
    %282 = vmatpush1.msra.mxu0 %v164
    %283 = vmatprep.subr.mxu0 0.0
    %284 = vmatpush1.msra.mxu0 %v165
    %285 = vmatprep.subr.mxu0 0.0
    %286 = vmatpush1.msra.mxu0 0.0
    %287 = vmatprep.subr.mxu0 0.0
    %288 = vmatpush1.msra.mxu0 0.0
    %289 = vmatprep.subr.mxu0 0.0
    %290 = vmatpush1.msra.mxu0 0.0
    %291 = vmatprep.subr.mxu0 0.0
    %292 = vmatpush1.msra.mxu0 0.0
    %293 = vmatprep.subr.mxu0 0.0
    %294 = vmatpush1.msra.mxu0 0.0
    %295 = vmatprep.subr.mxu0 0.0
    %296 = vmatpush1.msra.mxu0 0.0
    %297 = vmatprep.subr.mxu0 0.0
    %298 = vmatpush1.msra.mxu0 0.0
    %299 = vmatprep.subr.mxu0 0.0
    %300 = vmatpush1.msra.mxu0 0.0
    %301 = vmatprep.subr.mxu0 0.0
    %302 = vmatpush1.msra.mxu0 0.0
    %303 = vmatprep.subr.mxu0 0.0
    %304 = vmatpush1.msra.mxu0 0.0
    %305 = vmatprep.subr.mxu0 0.0
    %306 = vmatpush1.msra.mxu0 0.0
    %307 = vmatprep.subr.mxu0 0.0
    %308 = vmatpush1.msra.mxu0 0.0
    %309 = vmatprep.subr.mxu0 0.0
    %310 = vmatpush1.msra.mxu0 0.0
    %311 = vmatprep.subr.mxu0 0.0
    %312 = vmatpush1.msra.mxu0 0.0
    %313 = vmatprep.subr.mxu0 0.0
    %314 = vmatpush1.msra.mxu0 0.0
    %315 = vmatprep.subr.mxu0 0.0
    %316 = vmatpush1.msra.mxu0 0.0
    %317 = vmatprep.subr.mxu0 0.0
    %318 = vmatpush1.msra.mxu0 0.0
    %319 = vmatprep.subr.mxu0 0.0
    %320 = vmatpush1.msra.mxu0 0.0
    %321 = vmatprep.subr.mxu0 0.0
    %322 = vmatpush1.msra.mxu0 0.0
    %323 = vmatprep.subr.mxu0 0.0
    %324 = vmatpush1.msra.mxu0 0.0
    %325 = vmatprep.subr.mxu0 0.0
    %326 = vmatpush1.msra.mxu0 0.0
    %327 = vmatprep.subr.mxu0 0.0
    %328 = vmatpush1.msra.mxu0 0.0
    %329 = vmatprep.subr.mxu0 0.0
    %330 = vmatpush1.msra.mxu0 0.0
    %331 = vmatprep.subr.mxu0 0.0
    %332 = vmatpush1.msra.mxu0 0.0
    %333 = vmatprep.subr.mxu0 0.0
    %334 = vmatpush1.msra.mxu0 0.0
    %335 = vmatprep.subr.mxu0 0.0
    %336 = vmatpush1.msra.mxu0 0.0
    %337 = vmatprep.subr.mxu0 0.0
    %338 = vmatpush1.msra.mxu0 0.0
    %339 = vmatprep.subr.mxu0 0.0
    %340 = vmatpush1.msra.mxu0 0.0
    %341 = vmatprep.mubr.f32.mxu0 0.0
    %342 = vmatmul.mubr.f32.gmra.mrb[0].mxu0 %v275
    %v343 = vpop.f32.mrb[0].mxu0
    %v344 = vadd.f32 %v272, %v343
    %v345 = vpop.f32.mrb[0].mxu0
    %346 = vdwg.mxu0
    %v347 = vmax.f32 %v344, 0.0
    %v349 = vlaneseq
    %v350 = vshrl.u32 %v349, 7
    %v351 = vsub.s32 0, %v350
    %v352 = vrot.slane %v167, %v351
    %v354 = vmul.f32 %v347, %v352
    %vm355 = vcmask 254976
    %v356 = vsel %vm355, %v354, 0.0
    %357 = vadd.xlane.f32.xlu0 %v356
    %v358 = vpop.xlane.xlu0 %357
    %v359 = vadd.f32 %v358, 0.0
    %v361 = vlaneseq
    %v362 = vshrl.u32 %v361, 7
    %v363 = vsub.s32 0, %v362
    %v364 = vrot.slane %v168, %v363
    %v366 = vadd.f32 %v359, %v364
    %367 = vmatprep.subr.mxu0 0.0
    %368 = vmatpush1.msra.mxu0 %v169
    %369 = vmatprep.subr.mxu0 0.0
    %370 = vmatpush1.msra.mxu0 %v170
    %371 = vmatprep.subr.mxu0 0.0
    %372 = vmatpush1.msra.mxu0 %v171
    %373 = vmatprep.subr.mxu0 0.0
    %374 = vmatpush1.msra.mxu0 %v172
    %375 = vmatprep.subr.mxu0 0.0
    %376 = vmatpush1.msra.mxu0 0.0
    %377 = vmatprep.subr.mxu0 0.0
    %378 = vmatpush1.msra.mxu0 0.0
    %379 = vmatprep.subr.mxu0 0.0
    %380 = vmatpush1.msra.mxu0 0.0
    %381 = vmatprep.subr.mxu0 0.0
    %382 = vmatpush1.msra.mxu0 0.0
    %383 = vmatprep.subr.mxu0 0.0
    %384 = vmatpush1.msra.mxu0 0.0
    %385 = vmatprep.subr.mxu0 0.0
    %386 = vmatpush1.msra.mxu0 0.0
    %387 = vmatprep.subr.mxu0 0.0
    %388 = vmatpush1.msra.mxu0 0.0
    %389 = vmatprep.subr.mxu0 0.0
    %390 = vmatpush1.msra.mxu0 0.0
    %391 = vmatprep.subr.mxu0 0.0
    %392 = vmatpush1.msra.mxu0 0.0
    %393 = vmatprep.subr.mxu0 0.0
    %394 = vmatpush1.msra.mxu0 0.0
    %395 = vmatprep.subr.mxu0 0.0
    %396 = vmatpush1.msra.mxu0 0.0
    %397 = vmatprep.subr.mxu0 0.0
    %398 = vmatpush1.msra.mxu0 0.0
    %399 = vmatprep.subr.mxu0 0.0
    %400 = vmatpush1.msra.mxu0 0.0
    %401 = vmatprep.subr.mxu0 0.0
    %402 = vmatpush1.msra.mxu0 0.0
    %403 = vmatprep.subr.mxu0 0.0
    %404 = vmatpush1.msra.mxu0 0.0
    %405 = vmatprep.subr.mxu0 0.0
    %406 = vmatpush1.msra.mxu0 0.0
    %407 = vmatprep.subr.mxu0 0.0
    %408 = vmatpush1.msra.mxu0 0.0
    %409 = vmatprep.subr.mxu0 0.0
    %410 = vmatpush1.msra.mxu0 0.0
    %411 = vmatprep.subr.mxu0 0.0
    %412 = vmatpush1.msra.mxu0 0.0
    %413 = vmatprep.subr.mxu0 0.0
    %414 = vmatpush1.msra.mxu0 0.0
    %415 = vmatprep.subr.mxu0 0.0
    %416 = vmatpush1.msra.mxu0 0.0
    %417 = vmatprep.subr.mxu0 0.0
    %418 = vmatpush1.msra.mxu0 0.0
    %419 = vmatprep.subr.mxu0 0.0
    %420 = vmatpush1.msra.mxu0 0.0
    %421 = vmatprep.subr.mxu0 0.0
    %422 = vmatpush1.msra.mxu0 0.0
    %423 = vmatprep.subr.mxu0 0.0
    %424 = vmatpush1.msra.mxu0 0.0
    %425 = vmatprep.subr.mxu0 0.0
    %426 = vmatpush1.msra.mxu0 0.0
    %427 = vmatprep.subr.mxu0 0.0
    %428 = vmatpush1.msra.mxu0 0.0
    %429 = vmatprep.subr.mxu0 0.0
    %430 = vmatpush1.msra.mxu0 0.0
    %431 = vmatprep.mubr.f32.mxu0 0.0
    %432 = vmatmul.mubr.f32.gmra.mrb[0].mxu0 %v195
    %v433 = vpop.f32.mrb[0].mxu0
    %v434 = vadd.f32 0.0, %v433
    %v435 = vpop.f32.mrb[0].mxu0
    %436 = vdwg.mxu0
    %v438 = vlaneseq
    %v439 = vshrl.u32 %v438, 7
    %v440 = vsub.s32 0, %v439
    %v441 = vrot.slane %v177, %v440
    %443 = vmatprep.subr.mxu0 0.0
    %444 = vmatpush1.msra.mxu0 %v173
    %445 = vmatprep.subr.mxu0 0.0
    %446 = vmatpush1.msra.mxu0 %v174
    %447 = vmatprep.subr.mxu0 0.0
    %448 = vmatpush1.msra.mxu0 %v175
    %449 = vmatprep.subr.mxu0 0.0
    %450 = vmatpush1.msra.mxu0 %v176
    %451 = vmatprep.subr.mxu0 0.0
    %452 = vmatpush1.msra.mxu0 0.0
    %453 = vmatprep.subr.mxu0 0.0
    %454 = vmatpush1.msra.mxu0 0.0
    %455 = vmatprep.subr.mxu0 0.0
    %456 = vmatpush1.msra.mxu0 0.0
    %457 = vmatprep.subr.mxu0 0.0
    %458 = vmatpush1.msra.mxu0 0.0
    %459 = vmatprep.subr.mxu0 0.0
    %460 = vmatpush1.msra.mxu0 0.0
    %461 = vmatprep.subr.mxu0 0.0
    %462 = vmatpush1.msra.mxu0 0.0
    %463 = vmatprep.subr.mxu0 0.0
    %464 = vmatpush1.msra.mxu0 0.0
    %465 = vmatprep.subr.mxu0 0.0
    %466 = vmatpush1.msra.mxu0 0.0
    %467 = vmatprep.subr.mxu0 0.0
    %468 = vmatpush1.msra.mxu0 0.0
    %469 = vmatprep.subr.mxu0 0.0
    %470 = vmatpush1.msra.mxu0 0.0
    %471 = vmatprep.subr.mxu0 0.0
    %472 = vmatpush1.msra.mxu0 0.0
    %473 = vmatprep.subr.mxu0 0.0
    %474 = vmatpush1.msra.mxu0 0.0
    %475 = vmatprep.subr.mxu0 0.0
    %476 = vmatpush1.msra.mxu0 0.0
    %477 = vmatprep.subr.mxu0 0.0
    %478 = vmatpush1.msra.mxu0 0.0
    %479 = vmatprep.subr.mxu0 0.0
    %480 = vmatpush1.msra.mxu0 0.0
    %481 = vmatprep.subr.mxu0 0.0
    %482 = vmatpush1.msra.mxu0 0.0
    %483 = vmatprep.subr.mxu0 0.0
    %484 = vmatpush1.msra.mxu0 0.0
    %485 = vmatprep.subr.mxu0 0.0
    %486 = vmatpush1.msra.mxu0 0.0
    %487 = vmatprep.subr.mxu0 0.0
    %488 = vmatpush1.msra.mxu0 0.0
    %489 = vmatprep.subr.mxu0 0.0
    %490 = vmatpush1.msra.mxu0 0.0
    %491 = vmatprep.subr.mxu0 0.0
    %492 = vmatpush1.msra.mxu0 0.0
    %493 = vmatprep.subr.mxu0 0.0
    %494 = vmatpush1.msra.mxu0 0.0
    %495 = vmatprep.subr.mxu0 0.0
    %496 = vmatpush1.msra.mxu0 0.0
    %497 = vmatprep.subr.mxu0 0.0
    %498 = vmatpush1.msra.mxu0 0.0
    %499 = vmatprep.subr.mxu0 0.0
    %500 = vmatpush1.msra.mxu0 0.0
    %501 = vmatprep.subr.mxu0 0.0
    %502 = vmatpush1.msra.mxu0 0.0
    %503 = vmatprep.subr.mxu0 0.0
    %504 = vmatpush1.msra.mxu0 0.0
    %505 = vmatprep.subr.mxu0 0.0
    %506 = vmatpush1.msra.mxu0 0.0
    %507 = vmatprep.mubr.f32.mxu0 0.0
    %508 = vmatmul.mubr.f32.gmra.mrb[0].mxu0 %v195
    %v509 = vpop.f32.mrb[0].mxu0
    %v510 = vadd.f32 %v441, %v509
    %v511 = vpop.f32.mrb[0].mxu0
    %512 = vdwg.mxu0
    %s513 = scalar_lea.vmem [#allocation4], 2
    %v514 = vld [vmem:[%s513] sm:$0x3]
    %v516 = vsel %vm193, %v514, 0
    %518 = vmatprep.subr.mxu0 0.0
    %519 = vmatpush1.msra.mxu0 %v157
    %520 = vmatprep.subr.mxu0 0.0
    %521 = vmatpush1.msra.mxu0 %v158
    %522 = vmatprep.subr.mxu0 0.0
    %523 = vmatpush1.msra.mxu0 %v159
    %524 = vmatprep.subr.mxu0 0.0
    %525 = vmatpush1.msra.mxu0 %v160
    %526 = vmatprep.subr.mxu0 0.0
    %527 = vmatpush1.msra.mxu0 0.0
    %528 = vmatprep.subr.mxu0 0.0
    %529 = vmatpush1.msra.mxu0 0.0
    %530 = vmatprep.subr.mxu0 0.0
    %531 = vmatpush1.msra.mxu0 0.0
    %532 = vmatprep.subr.mxu0 0.0
    %533 = vmatpush1.msra.mxu0 0.0
    %534 = vmatprep.subr.mxu0 0.0
    %535 = vmatpush1.msra.mxu0 0.0
    %536 = vmatprep.subr.mxu0 0.0
    %537 = vmatpush1.msra.mxu0 0.0
    %538 = vmatprep.subr.mxu0 0.0
    %539 = vmatpush1.msra.mxu0 0.0
    %540 = vmatprep.subr.mxu0 0.0
    %541 = vmatpush1.msra.mxu0 0.0
    %542 = vmatprep.subr.mxu0 0.0
    %543 = vmatpush1.msra.mxu0 0.0
    %544 = vmatprep.subr.mxu0 0.0
    %545 = vmatpush1.msra.mxu0 0.0
    %546 = vmatprep.subr.mxu0 0.0
    %547 = vmatpush1.msra.mxu0 0.0
    %548 = vmatprep.subr.mxu0 0.0
    %549 = vmatpush1.msra.mxu0 0.0
    %550 = vmatprep.subr.mxu0 0.0
    %551 = vmatpush1.msra.mxu0 0.0
    %552 = vmatprep.subr.mxu0 0.0
    %553 = vmatpush1.msra.mxu0 0.0
    %554 = vmatprep.subr.mxu0 0.0
    %555 = vmatpush1.msra.mxu0 0.0
    %556 = vmatprep.subr.mxu0 0.0
    %557 = vmatpush1.msra.mxu0 0.0
    %558 = vmatprep.subr.mxu0 0.0
    %559 = vmatpush1.msra.mxu0 0.0
    %560 = vmatprep.subr.mxu0 0.0
    %561 = vmatpush1.msra.mxu0 0.0
    %562 = vmatprep.subr.mxu0 0.0
    %563 = vmatpush1.msra.mxu0 0.0
    %564 = vmatprep.subr.mxu0 0.0
    %565 = vmatpush1.msra.mxu0 0.0
    %566 = vmatprep.subr.mxu0 0.0
    %567 = vmatpush1.msra.mxu0 0.0
    %568 = vmatprep.subr.mxu0 0.0
    %569 = vmatpush1.msra.mxu0 0.0
    %570 = vmatprep.subr.mxu0 0.0
    %571 = vmatpush1.msra.mxu0 0.0
    %572 = vmatprep.subr.mxu0 0.0
    %573 = vmatpush1.msra.mxu0 0.0
    %574 = vmatprep.subr.mxu0 0.0
    %575 = vmatpush1.msra.mxu0 0.0
    %576 = vmatprep.subr.mxu0 0.0
    %577 = vmatpush1.msra.mxu0 0.0
    %578 = vmatprep.subr.mxu0 0.0
    %579 = vmatpush1.msra.mxu0 0.0
    %580 = vmatprep.subr.mxu0 0.0
    %581 = vmatpush1.msra.mxu0 0.0
    %582 = vmatprep.mubr.f32.mxu0 0.0
    %583 = vmatmul.mubr.f32.gmra.mrb[0].mxu0 %v516
    %v584 = vpop.f32.mrb[0].mxu0
    %v585 = vadd.f32 %v191, %v584
    %v586 = vpop.f32.mrb[0].mxu0
    %587 = vdwg.mxu0
    %v588 = vmax.f32 %v585, 0.0
    %v590 = vsel %vm193, %v588, 0
    %592 = vmatprep.subr.mxu0 0.0
    %593 = vmatpush1.msra.mxu0 %v162
    %594 = vmatprep.subr.mxu0 0.0
    %595 = vmatpush1.msra.mxu0 %v163
    %596 = vmatprep.subr.mxu0 0.0
    %597 = vmatpush1.msra.mxu0 %v164
    %598 = vmatprep.subr.mxu0 0.0
    %599 = vmatpush1.msra.mxu0 %v165
    %600 = vmatprep.subr.mxu0 0.0
    %601 = vmatpush1.msra.mxu0 0.0
    %602 = vmatprep.subr.mxu0 0.0
    %603 = vmatpush1.msra.mxu0 0.0
    %604 = vmatprep.subr.mxu0 0.0
    %605 = vmatpush1.msra.mxu0 0.0
    %606 = vmatprep.subr.mxu0 0.0
    %607 = vmatpush1.msra.mxu0 0.0
    %608 = vmatprep.subr.mxu0 0.0
    %609 = vmatpush1.msra.mxu0 0.0
    %610 = vmatprep.subr.mxu0 0.0
    %611 = vmatpush1.msra.mxu0 0.0
    %612 = vmatprep.subr.mxu0 0.0
    %613 = vmatpush1.msra.mxu0 0.0
    %614 = vmatprep.subr.mxu0 0.0
    %615 = vmatpush1.msra.mxu0 0.0
    %616 = vmatprep.subr.mxu0 0.0
    %617 = vmatpush1.msra.mxu0 0.0
    %618 = vmatprep.subr.mxu0 0.0
    %619 = vmatpush1.msra.mxu0 0.0
    %620 = vmatprep.subr.mxu0 0.0
    %621 = vmatpush1.msra.mxu0 0.0
    %622 = vmatprep.subr.mxu0 0.0
    %623 = vmatpush1.msra.mxu0 0.0
    %624 = vmatprep.subr.mxu0 0.0
    %625 = vmatpush1.msra.mxu0 0.0
    %626 = vmatprep.subr.mxu0 0.0
    %627 = vmatpush1.msra.mxu0 0.0
    %628 = vmatprep.subr.mxu0 0.0
    %629 = vmatpush1.msra.mxu0 0.0
    %630 = vmatprep.subr.mxu0 0.0
    %631 = vmatpush1.msra.mxu0 0.0
    %632 = vmatprep.subr.mxu0 0.0
    %633 = vmatpush1.msra.mxu0 0.0
    %634 = vmatprep.subr.mxu0 0.0
    %635 = vmatpush1.msra.mxu0 0.0
    %636 = vmatprep.subr.mxu0 0.0
    %637 = vmatpush1.msra.mxu0 0.0
    %638 = vmatprep.subr.mxu0 0.0
    %639 = vmatpush1.msra.mxu0 0.0
    %640 = vmatprep.subr.mxu0 0.0
    %641 = vmatpush1.msra.mxu0 0.0
    %642 = vmatprep.subr.mxu0 0.0
    %643 = vmatpush1.msra.mxu0 0.0
    %644 = vmatprep.subr.mxu0 0.0
    %645 = vmatpush1.msra.mxu0 0.0
    %646 = vmatprep.subr.mxu0 0.0
    %647 = vmatpush1.msra.mxu0 0.0
    %648 = vmatprep.subr.mxu0 0.0
    %649 = vmatpush1.msra.mxu0 0.0
    %650 = vmatprep.subr.mxu0 0.0
    %651 = vmatpush1.msra.mxu0 0.0
    %652 = vmatprep.subr.mxu0 0.0
    %653 = vmatpush1.msra.mxu0 0.0
    %654 = vmatprep.subr.mxu0 0.0
    %655 = vmatpush1.msra.mxu0 0.0
    %656 = vmatprep.mubr.f32.mxu0 0.0
    %657 = vmatmul.mubr.f32.gmra.mrb[0].mxu0 %v590
    %v658 = vpop.f32.mrb[0].mxu0
    %v659 = vadd.f32 %v272, %v658
    %v660 = vpop.f32.mrb[0].mxu0
    %661 = vdwg.mxu0
    %v662 = vmax.f32 %v659, 0.0
    %v663 = vmul.f32 %v662, %v352
    %v664 = vsel %vm355, %v663, 0.0
    %665 = vadd.xlane.f32.xlu0 %v664
    %v666 = vpop.xlane.xlu0 %665
    %v667 = vadd.f32 %v366, %v666
    %v668 = vadd.f32 %v667, %v364
    %669 = vmatprep.subr.mxu0 0.0
    %670 = vmatpush1.msra.mxu0 %v169
    %671 = vmatprep.subr.mxu0 0.0
    %672 = vmatpush1.msra.mxu0 %v170
    %673 = vmatprep.subr.mxu0 0.0
    %674 = vmatpush1.msra.mxu0 %v171
    %675 = vmatprep.subr.mxu0 0.0
    %676 = vmatpush1.msra.mxu0 %v172
    %677 = vmatprep.subr.mxu0 0.0
    %678 = vmatpush1.msra.mxu0 0.0
    %679 = vmatprep.subr.mxu0 0.0
    %680 = vmatpush1.msra.mxu0 0.0
    %681 = vmatprep.subr.mxu0 0.0
    %682 = vmatpush1.msra.mxu0 0.0
    %683 = vmatprep.subr.mxu0 0.0
    %684 = vmatpush1.msra.mxu0 0.0
    %685 = vmatprep.subr.mxu0 0.0
    %686 = vmatpush1.msra.mxu0 0.0
    %687 = vmatprep.subr.mxu0 0.0
    %688 = vmatpush1.msra.mxu0 0.0
    %689 = vmatprep.subr.mxu0 0.0
    %690 = vmatpush1.msra.mxu0 0.0
    %691 = vmatprep.subr.mxu0 0.0
    %692 = vmatpush1.msra.mxu0 0.0
    %693 = vmatprep.subr.mxu0 0.0
    %694 = vmatpush1.msra.mxu0 0.0
    %695 = vmatprep.subr.mxu0 0.0
    %696 = vmatpush1.msra.mxu0 0.0
    %697 = vmatprep.subr.mxu0 0.0
    %698 = vmatpush1.msra.mxu0 0.0
    %699 = vmatprep.subr.mxu0 0.0
    %700 = vmatpush1.msra.mxu0 0.0
    %701 = vmatprep.subr.mxu0 0.0
    %702 = vmatpush1.msra.mxu0 0.0
    %703 = vmatprep.subr.mxu0 0.0
    %704 = vmatpush1.msra.mxu0 0.0
    %705 = vmatprep.subr.mxu0 0.0
    %706 = vmatpush1.msra.mxu0 0.0
    %707 = vmatprep.subr.mxu0 0.0
    %708 = vmatpush1.msra.mxu0 0.0
    %709 = vmatprep.subr.mxu0 0.0
    %710 = vmatpush1.msra.mxu0 0.0
    %711 = vmatprep.subr.mxu0 0.0
    %712 = vmatpush1.msra.mxu0 0.0
    %713 = vmatprep.subr.mxu0 0.0
    %714 = vmatpush1.msra.mxu0 0.0
    %715 = vmatprep.subr.mxu0 0.0
    %716 = vmatpush1.msra.mxu0 0.0
    %717 = vmatprep.subr.mxu0 0.0
    %718 = vmatpush1.msra.mxu0 0.0
    %719 = vmatprep.subr.mxu0 0.0
    %720 = vmatpush1.msra.mxu0 0.0
    %721 = vmatprep.subr.mxu0 0.0
    %722 = vmatpush1.msra.mxu0 0.0
    %723 = vmatprep.subr.mxu0 0.0
    %724 = vmatpush1.msra.mxu0 0.0
    %725 = vmatprep.subr.mxu0 0.0
    %726 = vmatpush1.msra.mxu0 0.0
    %727 = vmatprep.subr.mxu0 0.0
    %728 = vmatpush1.msra.mxu0 0.0
    %729 = vmatprep.subr.mxu0 0.0
    %730 = vmatpush1.msra.mxu0 0.0
    %731 = vmatprep.subr.mxu0 0.0
    %732 = vmatpush1.msra.mxu0 0.0
    %733 = vmatprep.mubr.f32.mxu0 0.0
    %734 = vmatmul.mubr.f32.gmra.mrb[0].mxu0 %v516
    %v735 = vpop.f32.mrb[0].mxu0
    %v736 = vadd.f32 0.0, %v735
    %v737 = vpop.f32.mrb[0].mxu0
    %738 = vdwg.mxu0
    %739 = vmatprep.subr.mxu0 0.0
    %740 = vmatpush1.msra.mxu0 %v173
    %741 = vmatprep.subr.mxu0 0.0
    %742 = vmatpush1.msra.mxu0 %v174
    %743 = vmatprep.subr.mxu0 0.0
    %744 = vmatpush1.msra.mxu0 %v175
    %745 = vmatprep.subr.mxu0 0.0
    %746 = vmatpush1.msra.mxu0 %v176
    %747 = vmatprep.subr.mxu0 0.0
    %748 = vmatpush1.msra.mxu0 0.0
    %749 = vmatprep.subr.mxu0 0.0
    %750 = vmatpush1.msra.mxu0 0.0
    %751 = vmatprep.subr.mxu0 0.0
    %752 = vmatpush1.msra.mxu0 0.0
    %753 = vmatprep.subr.mxu0 0.0
    %754 = vmatpush1.msra.mxu0 0.0
    %755 = vmatprep.subr.mxu0 0.0
    %756 = vmatpush1.msra.mxu0 0.0
    %757 = vmatprep.subr.mxu0 0.0
    %758 = vmatpush1.msra.mxu0 0.0
    %759 = vmatprep.subr.mxu0 0.0
    %760 = vmatpush1.msra.mxu0 0.0
    %761 = vmatprep.subr.mxu0 0.0
    %762 = vmatpush1.msra.mxu0 0.0
    %763 = vmatprep.subr.mxu0 0.0
    %764 = vmatpush1.msra.mxu0 0.0
    %765 = vmatprep.subr.mxu0 0.0
    %766 = vmatpush1.msra.mxu0 0.0
    %767 = vmatprep.subr.mxu0 0.0
    %768 = vmatpush1.msra.mxu0 0.0
    %769 = vmatprep.subr.mxu0 0.0
    %770 = vmatpush1.msra.mxu0 0.0
    %771 = vmatprep.subr.mxu0 0.0
    %772 = vmatpush1.msra.mxu0 0.0
    %773 = vmatprep.subr.mxu0 0.0
    %774 = vmatpush1.msra.mxu0 0.0
    %775 = vmatprep.subr.mxu0 0.0
    %776 = vmatpush1.msra.mxu0 0.0
    %777 = vmatprep.subr.mxu0 0.0
    %778 = vmatpush1.msra.mxu0 0.0
    %779 = vmatprep.subr.mxu0 0.0
    %780 = vmatpush1.msra.mxu0 0.0
    %781 = vmatprep.subr.mxu0 0.0
    %782 = vmatpush1.msra.mxu0 0.0
    %783 = vmatprep.subr.mxu0 0.0
    %784 = vmatpush1.msra.mxu0 0.0
    %785 = vmatprep.subr.mxu0 0.0
    %786 = vmatpush1.msra.mxu0 0.0
    %787 = vmatprep.subr.mxu0 0.0
    %788 = vmatpush1.msra.mxu0 0.0
    %789 = vmatprep.subr.mxu0 0.0
    %790 = vmatpush1.msra.mxu0 0.0
    %791 = vmatprep.subr.mxu0 0.0
    %792 = vmatpush1.msra.mxu0 0.0
    %793 = vmatprep.subr.mxu0 0.0
    %794 = vmatpush1.msra.mxu0 0.0
    %795 = vmatprep.subr.mxu0 0.0
    %796 = vmatpush1.msra.mxu0 0.0
    %797 = vmatprep.subr.mxu0 0.0
    %798 = vmatpush1.msra.mxu0 0.0
    %799 = vmatprep.subr.mxu0 0.0
    %800 = vmatpush1.msra.mxu0 0.0
    %801 = vmatprep.subr.mxu0 0.0
    %802 = vmatpush1.msra.mxu0 0.0
    %803 = vmatprep.mubr.f32.mxu0 0.0
    %804 = vmatmul.mubr.f32.gmra.mrb[0].mxu0 %v516
    %v805 = vpop.f32.mrb[0].mxu0
    %v806 = vadd.f32 %v441, %v805
    %v807 = vpop.f32.mrb[0].mxu0
    %808 = vdwg.mxu0
    %v809 = vadd.f32 %v434, %v510
    %v810 = vmax.f32 %v809, 0.0
    %v812 = vlaneseq
    %v813 = vshrl.u32 %v812, 7
    %v814 = vsub.s32 0, %v813
    %v815 = vrot.slane %v182, %v814
    %v818 = vsel %vm193, %v810, 0
    %820 = vmatprep.subr.mxu0 0.0
    %821 = vmatpush1.msra.mxu0 %v178
    %822 = vmatprep.subr.mxu0 0.0
    %823 = vmatpush1.msra.mxu0 %v179
    %824 = vmatprep.subr.mxu0 0.0
    %825 = vmatpush1.msra.mxu0 %v180
    %826 = vmatprep.subr.mxu0 0.0
    %827 = vmatpush1.msra.mxu0 %v181
    %828 = vmatprep.subr.mxu0 0.0
    %829 = vmatpush1.msra.mxu0 0.0
    %830 = vmatprep.subr.mxu0 0.0
    %831 = vmatpush1.msra.mxu0 0.0
    %832 = vmatprep.subr.mxu0 0.0
    %833 = vmatpush1.msra.mxu0 0.0
    %834 = vmatprep.subr.mxu0 0.0
    %835 = vmatpush1.msra.mxu0 0.0
    %836 = vmatprep.subr.mxu0 0.0
    %837 = vmatpush1.msra.mxu0 0.0
    %838 = vmatprep.subr.mxu0 0.0
    %839 = vmatpush1.msra.mxu0 0.0
    %840 = vmatprep.subr.mxu0 0.0
    %841 = vmatpush1.msra.mxu0 0.0
    %842 = vmatprep.subr.mxu0 0.0
    %843 = vmatpush1.msra.mxu0 0.0
    %844 = vmatprep.subr.mxu0 0.0
    %845 = vmatpush1.msra.mxu0 0.0
    %846 = vmatprep.subr.mxu0 0.0
    %847 = vmatpush1.msra.mxu0 0.0
    %848 = vmatprep.subr.mxu0 0.0
    %849 = vmatpush1.msra.mxu0 0.0
    %850 = vmatprep.subr.mxu0 0.0
    %851 = vmatpush1.msra.mxu0 0.0
    %852 = vmatprep.subr.mxu0 0.0
    %853 = vmatpush1.msra.mxu0 0.0
    %854 = vmatprep.subr.mxu0 0.0
    %855 = vmatpush1.msra.mxu0 0.0
    %856 = vmatprep.subr.mxu0 0.0
    %857 = vmatpush1.msra.mxu0 0.0
    %858 = vmatprep.subr.mxu0 0.0
    %859 = vmatpush1.msra.mxu0 0.0
    %860 = vmatprep.subr.mxu0 0.0
    %861 = vmatpush1.msra.mxu0 0.0
    %862 = vmatprep.subr.mxu0 0.0
    %863 = vmatpush1.msra.mxu0 0.0
    %864 = vmatprep.subr.mxu0 0.0
    %865 = vmatpush1.msra.mxu0 0.0
    %866 = vmatprep.subr.mxu0 0.0
    %867 = vmatpush1.msra.mxu0 0.0
    %868 = vmatprep.subr.mxu0 0.0
    %869 = vmatpush1.msra.mxu0 0.0
    %870 = vmatprep.subr.mxu0 0.0
    %871 = vmatpush1.msra.mxu0 0.0
    %872 = vmatprep.subr.mxu0 0.0
    %873 = vmatpush1.msra.mxu0 0.0
    %874 = vmatprep.subr.mxu0 0.0
    %875 = vmatpush1.msra.mxu0 0.0
    %876 = vmatprep.subr.mxu0 0.0
    %877 = vmatpush1.msra.mxu0 0.0
    %878 = vmatprep.subr.mxu0 0.0
    %879 = vmatpush1.msra.mxu0 0.0
    %880 = vmatprep.subr.mxu0 0.0
    %881 = vmatpush1.msra.mxu0 0.0
    %882 = vmatprep.subr.mxu0 0.0
    %883 = vmatpush1.msra.mxu0 0.0
    %884 = vmatprep.mubr.f32.mxu0 0.0
    %885 = vmatmul.mubr.f32.gmra.mrb[0].mxu0 %v818
    %v886 = vpop.f32.mrb[0].mxu0
    %v887 = vadd.f32 %v815, %v886
    %v888 = vpop.f32.mrb[0].mxu0
    %889 = vdwg.mxu0
    %v890 = vmax.f32 %v887, 0.0
    %v892 = vlaneseq
    %v893 = vshrl.u32 %v892, 7
    %v894 = vsub.s32 0, %v893
    %v895 = vrot.slane %v183, %v894
    %v897 = vmul.f32 %v890, %v895
    %v898 = vsel %vm355, %v897, 0.0
    %899 = vadd.xlane.f32.xlu0 %v898
    %v900 = vpop.xlane.xlu0 %899
    %v902 = vlaneseq
    %v903 = vshrl.u32 %v902, 7
    %v904 = vsub.s32 0, %v903
    %v905 = vrot.slane %v184, %v904
    %v907 = vadd.f32 %v900, %v905
    %v908 = vmul.f32 %v185, %v907
    %v909 = vadd.f32 %v668, %v908
    %v910 = vadd.f32 %v434, %v806
    %v911 = vmax.f32 %v910, 0.0
    %v913 = vsel %vm193, %v911, 0
    %915 = vmatprep.subr.mxu0 0.0
    %916 = vmatpush1.msra.mxu0 %v178
    %917 = vmatprep.subr.mxu0 0.0
    %918 = vmatpush1.msra.mxu0 %v179
    %919 = vmatprep.subr.mxu0 0.0
    %920 = vmatpush1.msra.mxu0 %v180
    %921 = vmatprep.subr.mxu0 0.0
    %922 = vmatpush1.msra.mxu0 %v181
    %923 = vmatprep.subr.mxu0 0.0
    %924 = vmatpush1.msra.mxu0 0.0
    %925 = vmatprep.subr.mxu0 0.0
    %926 = vmatpush1.msra.mxu0 0.0
    %927 = vmatprep.subr.mxu0 0.0
    %928 = vmatpush1.msra.mxu0 0.0
    %929 = vmatprep.subr.mxu0 0.0
    %930 = vmatpush1.msra.mxu0 0.0
    %931 = vmatprep.subr.mxu0 0.0
    %932 = vmatpush1.msra.mxu0 0.0
    %933 = vmatprep.subr.mxu0 0.0
    %934 = vmatpush1.msra.mxu0 0.0
    %935 = vmatprep.subr.mxu0 0.0
    %936 = vmatpush1.msra.mxu0 0.0
    %937 = vmatprep.subr.mxu0 0.0
    %938 = vmatpush1.msra.mxu0 0.0
    %939 = vmatprep.subr.mxu0 0.0
    %940 = vmatpush1.msra.mxu0 0.0
    %941 = vmatprep.subr.mxu0 0.0
    %942 = vmatpush1.msra.mxu0 0.0
    %943 = vmatprep.subr.mxu0 0.0
    %944 = vmatpush1.msra.mxu0 0.0
    %945 = vmatprep.subr.mxu0 0.0
    %946 = vmatpush1.msra.mxu0 0.0
    %947 = vmatprep.subr.mxu0 0.0
    %948 = vmatpush1.msra.mxu0 0.0
    %949 = vmatprep.subr.mxu0 0.0
    %950 = vmatpush1.msra.mxu0 0.0
    %951 = vmatprep.subr.mxu0 0.0
    %952 = vmatpush1.msra.mxu0 0.0
    %953 = vmatprep.subr.mxu0 0.0
    %954 = vmatpush1.msra.mxu0 0.0
    %955 = vmatprep.subr.mxu0 0.0
    %956 = vmatpush1.msra.mxu0 0.0
    %957 = vmatprep.subr.mxu0 0.0
    %958 = vmatpush1.msra.mxu0 0.0
    %959 = vmatprep.subr.mxu0 0.0
    %960 = vmatpush1.msra.mxu0 0.0
    %961 = vmatprep.subr.mxu0 0.0
    %962 = vmatpush1.msra.mxu0 0.0
    %963 = vmatprep.subr.mxu0 0.0
    %964 = vmatpush1.msra.mxu0 0.0
    %965 = vmatprep.subr.mxu0 0.0
    %966 = vmatpush1.msra.mxu0 0.0
    %967 = vmatprep.subr.mxu0 0.0
    %968 = vmatpush1.msra.mxu0 0.0
    %969 = vmatprep.subr.mxu0 0.0
    %970 = vmatpush1.msra.mxu0 0.0
    %971 = vmatprep.subr.mxu0 0.0
    %972 = vmatpush1.msra.mxu0 0.0
    %973 = vmatprep.subr.mxu0 0.0
    %974 = vmatpush1.msra.mxu0 0.0
    %975 = vmatprep.subr.mxu0 0.0
    %976 = vmatpush1.msra.mxu0 0.0
    %977 = vmatprep.subr.mxu0 0.0
    %978 = vmatpush1.msra.mxu0 0.0
    %979 = vmatprep.mubr.f32.mxu0 0.0
    %980 = vmatmul.mubr.f32.gmra.mrb[0].mxu0 %v913
    %v981 = vpop.f32.mrb[0].mxu0
    %v982 = vadd.f32 %v815, %v981
    %v983 = vpop.f32.mrb[0].mxu0
    %984 = vdwg.mxu0
    %v985 = vmax.f32 %v982, 0.0
    %v986 = vmul.f32 %v985, %v895
    %v987 = vsel %vm355, %v986, 0.0
    %988 = vadd.xlane.f32.xlu0 %v987
    %v989 = vpop.xlane.xlu0 %988
    %v990 = vadd.f32 %v989, %v905
    %992 = vrot.lane.b32.xlu0 %v990, 1
    %v993 = vpop.permute.xlu0 %992
    %v995 = vmul.f32 %v185, %v993
    %997 = vrot.lane.b32.xlu0 %v995, 127
    %v998 = vpop.permute.xlu0 %997
    %v1000 = vadd.f32 %v909, %v998
    %v1001 = vadd.f32 %v736, %v510
    %v1002 = vmax.f32 %v1001, 0.0
    %v1004 = vsel %vm193, %v1002, 0
    %1006 = vmatprep.subr.mxu0 0.0
    %1007 = vmatpush1.msra.mxu0 %v178
    %1008 = vmatprep.subr.mxu0 0.0
    %1009 = vmatpush1.msra.mxu0 %v179
    %1010 = vmatprep.subr.mxu0 0.0
    %1011 = vmatpush1.msra.mxu0 %v180
    %1012 = vmatprep.subr.mxu0 0.0
    %1013 = vmatpush1.msra.mxu0 %v181
    %1014 = vmatprep.subr.mxu0 0.0
    %1015 = vmatpush1.msra.mxu0 0.0
    %1016 = vmatprep.subr.mxu0 0.0
    %1017 = vmatpush1.msra.mxu0 0.0
    %1018 = vmatprep.subr.mxu0 0.0
    %1019 = vmatpush1.msra.mxu0 0.0
    %1020 = vmatprep.subr.mxu0 0.0
    %1021 = vmatpush1.msra.mxu0 0.0
    %1022 = vmatprep.subr.mxu0 0.0
    %1023 = vmatpush1.msra.mxu0 0.0
    %1024 = vmatprep.subr.mxu0 0.0
    %1025 = vmatpush1.msra.mxu0 0.0
    %1026 = vmatprep.subr.mxu0 0.0
    %1027 = vmatpush1.msra.mxu0 0.0
    %1028 = vmatprep.subr.mxu0 0.0
    %1029 = vmatpush1.msra.mxu0 0.0
    %1030 = vmatprep.subr.mxu0 0.0
    %1031 = vmatpush1.msra.mxu0 0.0
    %1032 = vmatprep.subr.mxu0 0.0
    %1033 = vmatpush1.msra.mxu0 0.0
    %1034 = vmatprep.subr.mxu0 0.0
    %1035 = vmatpush1.msra.mxu0 0.0
    %1036 = vmatprep.subr.mxu0 0.0
    %1037 = vmatpush1.msra.mxu0 0.0
    %1038 = vmatprep.subr.mxu0 0.0
    %1039 = vmatpush1.msra.mxu0 0.0
    %1040 = vmatprep.subr.mxu0 0.0
    %1041 = vmatpush1.msra.mxu0 0.0
    %1042 = vmatprep.subr.mxu0 0.0
    %1043 = vmatpush1.msra.mxu0 0.0
    %1044 = vmatprep.subr.mxu0 0.0
    %1045 = vmatpush1.msra.mxu0 0.0
    %1046 = vmatprep.subr.mxu0 0.0
    %1047 = vmatpush1.msra.mxu0 0.0
    %1048 = vmatprep.subr.mxu0 0.0
    %1049 = vmatpush1.msra.mxu0 0.0
    %1050 = vmatprep.subr.mxu0 0.0
    %1051 = vmatpush1.msra.mxu0 0.0
    %1052 = vmatprep.subr.mxu0 0.0
    %1053 = vmatpush1.msra.mxu0 0.0
    %1054 = vmatprep.subr.mxu0 0.0
    %1055 = vmatpush1.msra.mxu0 0.0
    %1056 = vmatprep.subr.mxu0 0.0
    %1057 = vmatpush1.msra.mxu0 0.0
    %1058 = vmatprep.subr.mxu0 0.0
    %1059 = vmatpush1.msra.mxu0 0.0
    %1060 = vmatprep.subr.mxu0 0.0
    %1061 = vmatpush1.msra.mxu0 0.0
    %1062 = vmatprep.subr.mxu0 0.0
    %1063 = vmatpush1.msra.mxu0 0.0
    %1064 = vmatprep.subr.mxu0 0.0
    %1065 = vmatpush1.msra.mxu0 0.0
    %1066 = vmatprep.subr.mxu0 0.0
    %1067 = vmatpush1.msra.mxu0 0.0
    %1068 = vmatprep.subr.mxu0 0.0
    %1069 = vmatpush1.msra.mxu0 0.0
    %1070 = vmatprep.mubr.f32.mxu0 0.0
    %1071 = vmatmul.mubr.f32.gmra.mrb[0].mxu0 %v1004
    %v1072 = vpop.f32.mrb[0].mxu0
    %v1073 = vadd.f32 %v815, %v1072
    %v1074 = vpop.f32.mrb[0].mxu0
    %1075 = vdwg.mxu0
    %v1076 = vmax.f32 %v1073, 0.0
    %v1077 = vmul.f32 %v1076, %v895
    %v1078 = vsel %vm355, %v1077, 0.0
    %1079 = vadd.xlane.f32.xlu0 %v1078
    %v1080 = vpop.xlane.xlu0 %1079
    %v1081 = vadd.f32 %v1080, %v905
    %1083 = vrot.lane.b32.xlu0 %v1081, 2
    %v1084 = vpop.permute.xlu0 %1083
    %v1086 = vmul.f32 %v185, %v1084
    %1088 = vrot.lane.b32.xlu0 %v1086, 126
    %v1089 = vpop.permute.xlu0 %1088
    %v1091 = vadd.f32 %v1000, %v1089
    %v1092 = vadd.f32 %v736, %v806
    %v1093 = vmax.f32 %v1092, 0.0
    %v1095 = vsel %vm193, %v1093, 0
    %1097 = vmatprep.subr.mxu0 0.0
    %1098 = vmatpush1.msra.mxu0 %v178
    %1099 = vmatprep.subr.mxu0 0.0
    %1100 = vmatpush1.msra.mxu0 %v179
    %1101 = vmatprep.subr.mxu0 0.0
    %1102 = vmatpush1.msra.mxu0 %v180
    %1103 = vmatprep.subr.mxu0 0.0
    %1104 = vmatpush1.msra.mxu0 %v181
    %1105 = vmatprep.subr.mxu0 0.0
    %1106 = vmatpush1.msra.mxu0 0.0
    %1107 = vmatprep.subr.mxu0 0.0
    %1108 = vmatpush1.msra.mxu0 0.0
    %1109 = vmatprep.subr.mxu0 0.0
    %1110 = vmatpush1.msra.mxu0 0.0
    %1111 = vmatprep.subr.mxu0 0.0
    %1112 = vmatpush1.msra.mxu0 0.0
    %1113 = vmatprep.subr.mxu0 0.0
    %1114 = vmatpush1.msra.mxu0 0.0
    %1115 = vmatprep.subr.mxu0 0.0
    %1116 = vmatpush1.msra.mxu0 0.0
    %1117 = vmatprep.subr.mxu0 0.0
    %1118 = vmatpush1.msra.mxu0 0.0
    %1119 = vmatprep.subr.mxu0 0.0
    %1120 = vmatpush1.msra.mxu0 0.0
    %1121 = vmatprep.subr.mxu0 0.0
    %1122 = vmatpush1.msra.mxu0 0.0
    %1123 = vmatprep.subr.mxu0 0.0
    %1124 = vmatpush1.msra.mxu0 0.0
    %1125 = vmatprep.subr.mxu0 0.0
    %1126 = vmatpush1.msra.mxu0 0.0
    %1127 = vmatprep.subr.mxu0 0.0
    %1128 = vmatpush1.msra.mxu0 0.0
    %1129 = vmatprep.subr.mxu0 0.0
    %1130 = vmatpush1.msra.mxu0 0.0
    %1131 = vmatprep.subr.mxu0 0.0
    %1132 = vmatpush1.msra.mxu0 0.0
    %1133 = vmatprep.subr.mxu0 0.0
    %1134 = vmatpush1.msra.mxu0 0.0
    %1135 = vmatprep.subr.mxu0 0.0
    %1136 = vmatpush1.msra.mxu0 0.0
    %1137 = vmatprep.subr.mxu0 0.0
    %1138 = vmatpush1.msra.mxu0 0.0
    %1139 = vmatprep.subr.mxu0 0.0
    %1140 = vmatpush1.msra.mxu0 0.0
    %1141 = vmatprep.subr.mxu0 0.0
    %1142 = vmatpush1.msra.mxu0 0.0
    %1143 = vmatprep.subr.mxu0 0.0
    %1144 = vmatpush1.msra.mxu0 0.0
    %1145 = vmatprep.subr.mxu0 0.0
    %1146 = vmatpush1.msra.mxu0 0.0
    %1147 = vmatprep.subr.mxu0 0.0
    %1148 = vmatpush1.msra.mxu0 0.0
    %1149 = vmatprep.subr.mxu0 0.0
    %1150 = vmatpush1.msra.mxu0 0.0
    %1151 = vmatprep.subr.mxu0 0.0
    %1152 = vmatpush1.msra.mxu0 0.0
    %1153 = vmatprep.subr.mxu0 0.0
    %1154 = vmatpush1.msra.mxu0 0.0
    %1155 = vmatprep.subr.mxu0 0.0
    %1156 = vmatpush1.msra.mxu0 0.0
    %1157 = vmatprep.subr.mxu0 0.0
    %1158 = vmatpush1.msra.mxu0 0.0
    %1159 = vmatprep.subr.mxu0 0.0
    %1160 = vmatpush1.msra.mxu0 0.0
    %1161 = vmatprep.mubr.f32.mxu0 0.0
    %1162 = vmatmul.mubr.f32.gmra.mrb[0].mxu0 %v1095
    %v1163 = vpop.f32.mrb[0].mxu0
    %v1164 = vadd.f32 %v815, %v1163
    %v1165 = vpop.f32.mrb[0].mxu0
    %1166 = vdwg.mxu0
    %v1167 = vmax.f32 %v1164, 0.0
    %v1168 = vmul.f32 %v1167, %v895
    %v1169 = vsel %vm355, %v1168, 0.0
    %1170 = vadd.xlane.f32.xlu0 %v1169
    %v1171 = vpop.xlane.xlu0 %1170
    %v1172 = vadd.f32 %v1171, %v905
    %1174 = vrot.lane.b32.xlu0 %v1172, 3
    %v1175 = vpop.permute.xlu0 %1174
    %v1177 = vmul.f32 %v185, %v1175
    %1179 = vrot.lane.b32.xlu0 %v1177, 125
    %v1180 = vpop.permute.xlu0 %1179
    %v1182 = vadd.f32 %v1091, %v1180
    %vm1183 = vcmask 1024
    %1184 = vst.msk [vmem:[%s15] sm:$0x3] %vm1183, %v1182
    // Predicated region
    $region94: #{tpu_custom_call.1} parent=1 // pred_check
      _
    $region95: #{tpu_custom_call.1} parent=1 // pred_check_branch
      %1186 = sbr.rel (0) target = $region97
    $region96: #{tpu_custom_call.1} parent=1 // pred_region
      _
    $region97: #{tpu_custom_call.1} parent=1 // pred_fallthru
      _
    // Predicated region
    $region98: #{tpu_custom_call.1} parent=1 // pred_check
      _
    $region99: #{tpu_custom_call.1} parent=1 // pred_check_branch
      %1188 = sbr.rel (0) target = $region101
    $region100: #{tpu_custom_call.1} parent=1 // pred_region
      _
    $region101: #{tpu_custom_call.1} parent=1 // pred_fallthru
      _
    %1189 = vsyncpa [#allocation5], 1
    %1190 = vsyncpa [#allocation7], 1
    %1191 = vsyncpa [#allocation10], 1
    %1192 = vsyncpa [#allocation13], 1
    %1193 = vsyncpa [#allocation16], 1

</llo_original>
